<compile_context>
chip_gen: v6e
topology: v6e:2x2x1
jax: 0.10.0
libtpu: 0.0.40
codegen_flags: <defaults>
</compile_context>

<pallas_src>
import functools

import jax
import jax.numpy as jnp
from jax.experimental import pallas as pl
from jax.experimental.pallas import tpu as pltpu

_VMEM_LIMIT = 32 * 1024 * 1024  # explicit scoped-VMEM budget, safe on v5e/v6e/v7x


def _pick_tile(dim, target, quantum):
    """Largest power-of-two tile <= target that divides dim; else the full dim."""
    t = target
    while t >= quantum:
        if dim % t == 0:
            return t
        t //= 2
    return dim


# ---------------------------------------------------------------------------
# Tiled linear:  o = x @ w + b   (MXU matmul, f32 accumulate, pipelined)
# ---------------------------------------------------------------------------
def _linear_kernel(x_ref, w_ref, b_ref, o_ref, acc_ref):
    k = pl.program_id(2)

    @pl.when(k == 0)
    def _():
        acc_ref[...] = jnp.zeros_like(acc_ref)

    acc_ref[...] += jnp.dot(
        x_ref[...], w_ref[...], preferred_element_type=jnp.float32
    )

    @pl.when(k == pl.num_programs(2) - 1)
    def _():
        o_ref[...] = (acc_ref[...] + b_ref[...].astype(jnp.float32)).astype(
            o_ref.dtype
        )


def _linear(x2d, w, b):
    """x2d: (T, Cin), w: (Cin, Cout), b: (1, Cout) -> (T, Cout)."""
    T, Cin = x2d.shape
    Cout = w.shape[1]
    tm = _pick_tile(T, 256, 8)
    tn = _pick_tile(Cout, 256, 128)
    tk = _pick_tile(Cin, 512, 128)
    grid = (T // tm, Cout // tn, Cin // tk)
    return pl.pallas_call(
        _linear_kernel,
        out_shape=jax.ShapeDtypeStruct((T, Cout), x2d.dtype),
        grid_spec=pltpu.PrefetchScalarGridSpec(
            num_scalar_prefetch=0,
            grid=grid,
            in_specs=[
                pl.BlockSpec((tm, tk), lambda i, j, k: (i, k)),
                pl.BlockSpec((tk, tn), lambda i, j, k: (k, j)),
                pl.BlockSpec((1, tn), lambda i, j, k: (0, j)),
            ],
            out_specs=pl.BlockSpec((tm, tn), lambda i, j, k: (i, j)),
            scratch_shapes=[pltpu.VMEM((tm, tn), jnp.float32)],
        ),
        compiler_params=pltpu.CompilerParams(
            dimension_semantics=("parallel", "parallel", "arbitrary"),
            vmem_limit_bytes=_VMEM_LIMIT,
        ),
    )(x2d, w, b)


# ---------------------------------------------------------------------------
# Attention core: grid over batch, heads looped inside, lane-dense output.
#   q_ref : (M, C)   channels laid out head-major (h*D + d), chunk 0 of qkv(y)
#   kv_ref: (N, 2C)  channels [0:C]  = chunk 0 of qkv(x)  -> k
#                    channels [C:2C] = chunk 1 of qkv(x)  -> v
#   o_ref : (M, C)   == (attn @ v).transpose(1,2).reshape(M, C)
# ---------------------------------------------------------------------------
def _attn_kernel(q_ref, kv_ref, o_ref, *, num_heads, head_dim, dim, scale):
    C, D = dim, head_dim
    for h in range(num_heads):  # static unroll over heads
        lo = h * D
        q = q_ref[:, lo:lo + D]            # (M, D)
        k = kv_ref[:, lo:lo + D]           # (N, D)
        v = kv_ref[:, C + lo:C + lo + D]   # (N, D)
        # Contract over head_dim of both operands — no in-kernel transpose.
        s = jax.lax.dot_general(
            q, k, (((1,), (1,)), ((), ())), preferred_element_type=jnp.float32
        ) * scale
        s = s - jnp.max(s, axis=-1, keepdims=True)
        p = jnp.exp(s)
        p = p * pl.reciprocal(jnp.sum(p, axis=-1, keepdims=True), approx=True)
        o = jnp.dot(p.astype(v.dtype), v, preferred_element_type=jnp.float32)
        o_ref[:, lo:lo + D] = o.astype(o_ref.dtype)


def _attention(q_lin, kv_lin, num_heads, scale):
    """q_lin: (B, M, C), kv_lin: (B, N, 2C) -> (B, M, C)."""
    B, M, C = q_lin.shape
    _, N, C2 = kv_lin.shape
    D = C // num_heads
    kern = functools.partial(
        _attn_kernel, num_heads=num_heads, head_dim=D, dim=C, scale=scale
    )
    # TODO(synk): for very long kv sequences, add an N-tile grid axis with an
    # online-softmax (flash) accumulator so VMEM stays O(M*D + M*tile_N).
    return pl.pallas_call(
        kern,
        out_shape=jax.ShapeDtypeStruct((B, M, C), q_lin.dtype),
        grid=(B,),
        in_specs=[
            pl.BlockSpec((None, M, C), lambda b: (b, 0, 0)),
            pl.BlockSpec((None, N, C2), lambda b: (b, 0, 0)),
        ],
        out_specs=pl.BlockSpec((None, M, C), lambda b: (b, 0, 0)),
        compiler_params=pltpu.CompilerParams(
            dimension_semantics=("parallel",),
            vmem_limit_bytes=_VMEM_LIMIT,
        ),
    )(q_lin, kv_lin)


# ---------------------------------------------------------------------------
# Module forward (glue in plain JAX, hot path in Pallas)
# ---------------------------------------------------------------------------
def attention_forward(x, y, params, num_heads):
    B, N, C = x.shape
    _, M, _ = y.shape
    D = C // num_heads
    scale = D ** (-0.5)
    w_qkv, b_qkv, w_proj, b_proj = params

    # Only the chunks the module uses:
    #   k = chunk 0 of qkv(x), v = chunk 1 of qkv(x), q = chunk 0 of qkv(y).
    w_kv, b_kv = w_qkv[:, : 2 * C], b_qkv[:, : 2 * C]
    w_q, b_q = w_qkv[:, :C], b_qkv[:, :C]

    kv = _linear(x.reshape(B * N, C), w_kv, b_kv).reshape(B, N, 2 * C)
    q = _linear(y.reshape(B * M, C), w_q, b_q).reshape(B, M, C)

    # scaled-dot-product attention; output is already (B, M, C) head-major,
    # i.e. exactly (attn @ v).transpose(1,2).reshape(B, M, C).
    o = _attention(q, kv, num_heads, scale)

    out = _linear(o.reshape(B * M, C), w_proj, b_proj)
    return out.reshape(B, M, C)


# ---------------------------------------------------------------------------
# Pure-JAX reference (computes the full 3C qkv, validating the chunk slicing)
# ---------------------------------------------------------------------------
def attention_reference(x, y, params, num_heads):
    B, N, C = x.shape
    _, M, _ = y.shape
    H = num_heads
    D = C // H
    scale = D ** (-0.5)
    w_qkv, b_qkv, w_proj, b_proj = params

    kv = (x @ w_qkv + b_qkv).reshape(B, N, 3, H, D).transpose(2, 0, 3, 1, 4)
    qy = (y @ w_qkv + b_qkv).reshape(B, M, 3, H, D).transpose(2, 0, 3, 1, 4)
    q, k, v = qy[0], kv[0], kv[1]
    attn = jnp.einsum("bhmd,bhnd->bhmn", q, k) * scale
    attn = jax.nn.softmax(attn, axis=-1)
    o = jnp.einsum("bhmn,bhnd->bhmd", attn, v)
    o = o.transpose(0, 2, 1, 3).reshape(B, M, C)
    return o @ w_proj + b_proj


# ---------------------------------------------------------------------------
if __name__ == "__main__":
    B, N, M, C, H = 2, 16, 8, 32, 4  # batch, kv-seq, q-seq, dim, heads

    key = jax.random.PRNGKey(0)
    kx, ky, k1, k2, k3 = jax.random.split(key, 5)

    x = jax.random.normal(kx, (B, N, C), dtype=jnp.float32)
    y = jax.random.normal(ky, (B, M, C), dtype=jnp.float32)

    # PyTorch Linear stores (out, in); we store the transposed (in, out) so the
    # kernel does x @ w directly.
    w_qkv = jax.random.normal(k1, (C, 3 * C), dtype=jnp.float32) * 0.05
    b_qkv = jnp.zeros((1, 3 * C), dtype=jnp.float32)  # qkv_bias=False
    w_proj = jax.random.normal(k2, (C, C), dtype=jnp.float32) * 0.05
    b_proj = jax.random.normal(k3, (1, C), dtype=jnp.float32) * 0.05
    params = (w_qkv, b_qkv, w_proj, b_proj)

    out = jax.jit(attention_forward, static_argnums=3)(x, y, params, H)
    out = jax.block_until_ready(out)

    ref = attention_reference(x, y, params, H)
    assert out.shape == (B, M, C), out.shape
    assert jnp.allclose(out, ref, atol=2e-3, rtol=2e-3), "mismatch vs reference"

    print("KERNEL_OK")
</pallas_src>

<mosaic_0001>
module attributes {stable_mosaic.version = 11 : i64} {
  func.func @_linear_kernel(%arg0: i32, %arg1: i32, %arg2: i32, %arg3: memref<32x32xf32, #tpu.memory_space<vmem>>, %arg4: memref<32x64xf32, #tpu.memory_space<vmem>>, %arg5: memref<1x64xf32, #tpu.memory_space<vmem>>, %arg6: memref<32x64xf32, #tpu.memory_space<vmem>>, %arg7: memref<32x64xf32, #tpu.memory_space<vmem>>) attributes {dimension_semantics = [#tpu.dimension_semantics<parallel>, #tpu.dimension_semantics<parallel>, #tpu.dimension_semantics<arbitrary>], iteration_bounds = array<i64: 1, 1, 1>, scalar_prefetch = 0 : i64, scratch_operands = 1 : i64, tpu.core_type = #tpu.core_type<tc>, window_params = [{transform_indices = @transform_0, window_bounds = array<i64: 32, 32>}, {transform_indices = @transform_1, window_bounds = array<i64: 32, 64>}, {transform_indices = @transform_2, window_bounds = array<i64: 1, 64>}, {transform_indices = @transform_3, window_bounds = array<i64: 32, 64>}]} {
    %c0_i32 = arith.constant 0 : i32
    %0 = arith.cmpi eq, %arg2, %c0_i32 : i32
    %1 = arith.extui %0 : i1 to i32
    %c0_i32_0 = arith.constant 0 : i32
    %2 = arith.cmpi ne, %1, %c0_i32_0 : i32
    scf.if %2 {
      %cst_10 = arith.constant 0.000000e+00 : f32
      %12 = vector.broadcast %cst_10 : f32 to vector<32x64xf32>
      %c0_11 = arith.constant 0 : index
      %c0_12 = arith.constant 0 : index
      %13 = vector.load %arg7[%c0_11, %c0_12] : memref<32x64xf32, #tpu.memory_space<vmem>>, vector<32x64xf32>
      tpu.vector_store %arg7[%c0_11, %c0_12], %12 {strides = array<i32>} : memref<32x64xf32, #tpu.memory_space<vmem>>, vector<32x64xf32>,
    } else {
    }
    %c0 = arith.constant 0 : index
    %c0_1 = arith.constant 0 : index
    %3 = vector.load %arg7[%c0, %c0_1] : memref<32x64xf32, #tpu.memory_space<vmem>>, vector<32x64xf32>
    %c0_2 = arith.constant 0 : index
    %c0_3 = arith.constant 0 : index
    %4 = vector.load %arg3[%c0_2, %c0_3] : memref<32x32xf32, #tpu.memory_space<vmem>>, vector<32x32xf32>
    %c0_4 = arith.constant 0 : index
    %c0_5 = arith.constant 0 : index
    %5 = vector.load %arg4[%c0_4, %c0_5] : memref<32x64xf32, #tpu.memory_space<vmem>>, vector<32x64xf32>
    %cst = arith.constant dense<0.000000e+00> : vector<32x64xf32>
    %6 = tpu.matmul %4, %5, %cst {dimension_numbers = #tpu.dot_dimension_numbers<[1], [0], [0], [1], [0, 0, 1, 1], [], []>} : vector<32x32xf32>, vector<32x64xf32>, vector<32x64xf32> -> vector<32x64xf32>
    %7 = arith.addf %3, %6 : vector<32x64xf32>
    %c0_6 = arith.constant 0 : index
    %c0_7 = arith.constant 0 : index
    %8 = vector.load %arg7[%c0_6, %c0_7] : memref<32x64xf32, #tpu.memory_space<vmem>>, vector<32x64xf32>
    tpu.vector_store %arg7[%c0_6, %c0_7], %7 {strides = array<i32>} : memref<32x64xf32, #tpu.memory_space<vmem>>, vector<32x64xf32>,
    %c0_i32_8 = arith.constant 0 : i32
    %9 = arith.cmpi eq, %arg2, %c0_i32_8 : i32
    %10 = arith.extui %9 : i1 to i32
    %c0_i32_9 = arith.constant 0 : i32
    %11 = arith.cmpi ne, %10, %c0_i32_9 : i32
    scf.if %11 {
      %c0_10 = arith.constant 0 : index
      %c0_11 = arith.constant 0 : index
      %12 = vector.load %arg7[%c0_10, %c0_11] : memref<32x64xf32, #tpu.memory_space<vmem>>, vector<32x64xf32>
      %c0_12 = arith.constant 0 : index
      %c0_13 = arith.constant 0 : index
      %13 = vector.load %arg5[%c0_12, %c0_13] : memref<1x64xf32, #tpu.memory_space<vmem>>, vector<1x64xf32>
      %14 = vector.broadcast %13 : vector<1x64xf32> to vector<32x64xf32>
      %15 = arith.addf %12, %14 : vector<32x64xf32>
      %c0_14 = arith.constant 0 : index
      %c0_15 = arith.constant 0 : index
      %16 = vector.load %arg6[%c0_14, %c0_15] : memref<32x64xf32, #tpu.memory_space<vmem>>, vector<32x64xf32>
      tpu.vector_store %arg6[%c0_14, %c0_15], %15 {strides = array<i32>} : memref<32x64xf32, #tpu.memory_space<vmem>>, vector<32x64xf32>,
    } else {
    }
    return
  }
  func.func @transform_0(%arg0: i32, %arg1: i32, %arg2: i32) -> (i32, i32) {
    %c0_i32 = arith.constant 0 : i32
    return %arg0, %arg2 : i32, i32
  }
  func.func @transform_1(%arg0: i32, %arg1: i32, %arg2: i32) -> (i32, i32) {
    %c0_i32 = arith.constant 0 : i32
    return %arg2, %arg1 : i32, i32
  }
  func.func @transform_2(%arg0: i32, %arg1: i32, %arg2: i32) -> (i32, i32) {
    %c0_i32 = arith.constant 0 : i32
    %c0_i32_0 = arith.constant 0 : i32
    return %c0_i32, %arg1 : i32, i32
  }
  func.func @transform_3(%arg0: i32, %arg1: i32, %arg2: i32) -> (i32, i32) {
    %c0_i32 = arith.constant 0 : i32
    return %arg0, %arg1 : i32, i32
  }
}

module attributes {stable_mosaic.version = 11 : i64} {
  func.func @_linear_kernel(%arg0: i32, %arg1: i32, %arg2: i32, %arg3: memref<16x32xf32, #tpu.memory_space<vmem>>, %arg4: memref<32x32xf32, #tpu.memory_space<vmem>>, %arg5: memref<1x32xf32, #tpu.memory_space<vmem>>, %arg6: memref<16x32xf32, #tpu.memory_space<vmem>>, %arg7: memref<16x32xf32, #tpu.memory_space<vmem>>) attributes {dimension_semantics = [#tpu.dimension_semantics<parallel>, #tpu.dimension_semantics<parallel>, #tpu.dimension_semantics<arbitrary>], iteration_bounds = array<i64: 1, 1, 1>, scalar_prefetch = 0 : i64, scratch_operands = 1 : i64, tpu.core_type = #tpu.core_type<tc>, window_params = [{transform_indices = @transform_0, window_bounds = array<i64: 16, 32>}, {transform_indices = @transform_1, window_bounds = array<i64: 32, 32>}, {transform_indices = @transform_2, window_bounds = array<i64: 1, 32>}, {transform_indices = @transform_3, window_bounds = array<i64: 16, 32>}]} {
    %c0_i32 = arith.constant 0 : i32
    %0 = arith.cmpi eq, %arg2, %c0_i32 : i32
    %1 = arith.extui %0 : i1 to i32
    %c0_i32_0 = arith.constant 0 : i32
    %2 = arith.cmpi ne, %1, %c0_i32_0 : i32
    scf.if %2 {
      %cst_10 = arith.constant 0.000000e+00 : f32
      %12 = vector.broadcast %cst_10 : f32 to vector<16x32xf32>
      %c0_11 = arith.constant 0 : index
      %c0_12 = arith.constant 0 : index
      %13 = vector.load %arg7[%c0_11, %c0_12] : memref<16x32xf32, #tpu.memory_space<vmem>>, vector<16x32xf32>
      tpu.vector_store %arg7[%c0_11, %c0_12], %12 {strides = array<i32>} : memref<16x32xf32, #tpu.memory_space<vmem>>, vector<16x32xf32>,
    } else {
    }
    %c0 = arith.constant 0 : index
    %c0_1 = arith.constant 0 : index
    %3 = vector.load %arg7[%c0, %c0_1] : memref<16x32xf32, #tpu.memory_space<vmem>>, vector<16x32xf32>
    %c0_2 = arith.constant 0 : index
    %c0_3 = arith.constant 0 : index
    %4 = vector.load %arg3[%c0_2, %c0_3] : memref<16x32xf32, #tpu.memory_space<vmem>>, vector<16x32xf32>
    %c0_4 = arith.constant 0 : index
    %c0_5 = arith.constant 0 : index
    %5 = vector.load %arg4[%c0_4, %c0_5] : memref<32x32xf32, #tpu.memory_space<vmem>>, vector<32x32xf32>
    %cst = arith.constant dense<0.000000e+00> : vector<16x32xf32>
    %6 = tpu.matmul %4, %5, %cst {dimension_numbers = #tpu.dot_dimension_numbers<[1], [0], [0], [1], [0, 0, 1, 1], [], []>} : vector<16x32xf32>, vector<32x32xf32>, vector<16x32xf32> -> vector<16x32xf32>
    %7 = arith.addf %3, %6 : vector<16x32xf32>
    %c0_6 = arith.constant 0 : index
    %c0_7 = arith.constant 0 : index
    %8 = vector.load %arg7[%c0_6, %c0_7] : memref<16x32xf32, #tpu.memory_space<vmem>>, vector<16x32xf32>
    tpu.vector_store %arg7[%c0_6, %c0_7], %7 {strides = array<i32>} : memref<16x32xf32, #tpu.memory_space<vmem>>, vector<16x32xf32>,
    %c0_i32_8 = arith.constant 0 : i32
    %9 = arith.cmpi eq, %arg2, %c0_i32_8 : i32
    %10 = arith.extui %9 : i1 to i32
    %c0_i32_9 = arith.constant 0 : i32
    %11 = arith.cmpi ne, %10, %c0_i32_9 : i32
    scf.if %11 {
      %c0_10 = arith.constant 0 : index
      %c0_11 = arith.constant 0 : index
      %12 = vector.load %arg7[%c0_10, %c0_11] : memref<16x32xf32, #tpu.memory_space<vmem>>, vector<16x32xf32>
      %c0_12 = arith.constant 0 : index
      %c0_13 = arith.constant 0 : index
      %13 = vector.load %arg5[%c0_12, %c0_13] : memref<1x32xf32, #tpu.memory_space<vmem>>, vector<1x32xf32>
      %14 = vector.broadcast %13 : vector<1x32xf32> to vector<16x32xf32>
      %15 = arith.addf %12, %14 : vector<16x32xf32>
      %c0_14 = arith.constant 0 : index
      %c0_15 = arith.constant 0 : index
      %16 = vector.load %arg6[%c0_14, %c0_15] : memref<16x32xf32, #tpu.memory_space<vmem>>, vector<16x32xf32>
      tpu.vector_store %arg6[%c0_14, %c0_15], %15 {strides = array<i32>} : memref<16x32xf32, #tpu.memory_space<vmem>>, vector<16x32xf32>,
    } else {
    }
    return
  }
  func.func @transform_0(%arg0: i32, %arg1: i32, %arg2: i32) -> (i32, i32) {
    %c0_i32 = arith.constant 0 : i32
    return %arg0, %arg2 : i32, i32
  }
  func.func @transform_1(%arg0: i32, %arg1: i32, %arg2: i32) -> (i32, i32) {
    %c0_i32 = arith.constant 0 : i32
    return %arg2, %arg1 : i32, i32
  }
  func.func @transform_2(%arg0: i32, %arg1: i32, %arg2: i32) -> (i32, i32) {
    %c0_i32 = arith.constant 0 : i32
    %c0_i32_0 = arith.constant 0 : i32
    return %c0_i32, %arg1 : i32, i32
  }
  func.func @transform_3(%arg0: i32, %arg1: i32, %arg2: i32) -> (i32, i32) {
    %c0_i32 = arith.constant 0 : i32
    return %arg0, %arg1 : i32, i32
  }
}

module attributes {stable_mosaic.version = 11 : i64} {
  func.func @_attn_kernel(%arg0: i32, %arg1: memref<1x8x32xf32, #tpu.memory_space<vmem>>, %arg2: memref<1x16x64xf32, #tpu.memory_space<vmem>>, %arg3: memref<1x8x32xf32, #tpu.memory_space<vmem>>) attributes {dimension_semantics = [#tpu.dimension_semantics<parallel>], iteration_bounds = array<i64: 2>, scalar_prefetch = 0 : i64, scratch_operands = 0 : i64, tpu.core_type = #tpu.core_type<tc>, window_params = [{transform_indices = @transform_0, window_bounds = array<i64: 1, 8, 32>}, {transform_indices = @transform_1, window_bounds = array<i64: 1, 16, 64>}, {transform_indices = @transform_2, window_bounds = array<i64: 1, 8, 32>}]} {
    %c0 = arith.constant 0 : index
    %c0_0 = arith.constant 0 : index
    %c0_1 = arith.constant 0 : index
    %0 = vector.load %arg1[%c0, %c0_0, %c0_1] : memref<1x8x32xf32, #tpu.memory_space<vmem>>, vector<1x8x8xf32>
    %1 = vector.shape_cast %0 : vector<1x8x8xf32> to vector<8x8xf32>
    %c0_2 = arith.constant 0 : index
    %c0_3 = arith.constant 0 : index
    %c0_4 = arith.constant 0 : index
    %2 = vector.load %arg2[%c0_2, %c0_3, %c0_4] : memref<1x16x64xf32, #tpu.memory_space<vmem>>, vector<1x16x8xf32>
    %3 = vector.shape_cast %2 : vector<1x16x8xf32> to vector<16x8xf32>
    %c0_5 = arith.constant 0 : index
    %c0_6 = arith.constant 0 : index
    %c32 = arith.constant 32 : index
    %4 = vector.load %arg2[%c0_5, %c0_6, %c32] : memref<1x16x64xf32, #tpu.memory_space<vmem>>, vector<1x16x8xf32>
    %5 = vector.shape_cast %4 : vector<1x16x8xf32> to vector<16x8xf32>
    %cst = arith.constant dense<0.000000e+00> : vector<8x16xf32>
    %6 = tpu.matmul %1, %3, %cst {dimension_numbers = #tpu.dot_dimension_numbers<[1], [1], [0], [0], [0, 0, 1, 0], [], []>} : vector<8x8xf32>, vector<16x8xf32>, vector<8x16xf32> -> vector<8x16xf32>
    %cst_7 = arith.constant 0.353553385 : f32
    %7 = vector.broadcast %cst_7 : f32 to vector<8x16xf32>
    %8 = arith.mulf %6, %7 : vector<8x16xf32>
    %cst_8 = arith.constant dense<0xFF800000> : vector<8xf32>
    %9 = vector.multi_reduction <maximumf>, %8, %cst_8 [1] : vector<8x16xf32> to vector<8xf32>
    %10 = vector.shape_cast %9 : vector<8xf32> to vector<8x1xf32>
    %11 = vector.broadcast %10 : vector<8x1xf32> to vector<8x16xf32>
    %12 = arith.subf %8, %11 : vector<8x16xf32>
    %13 = math.exp %12 : vector<8x16xf32>
    %cst_9 = arith.constant dense<0.000000e+00> : vector<8xf32>
    %14 = vector.multi_reduction <add>, %13, %cst_9 [1] : vector<8x16xf32> to vector<8xf32>
    %15 = vector.shape_cast %14 : vector<8xf32> to vector<8x1xf32>
    %16 = tpu.reciprocal %15 {approx = true} : vector<8x1xf32> -> vector<8x1xf32>
    %17 = vector.broadcast %16 : vector<8x1xf32> to vector<8x16xf32>
    %18 = arith.mulf %13, %17 : vector<8x16xf32>
    %cst_10 = arith.constant dense<0.000000e+00> : vector<8x8xf32>
    %19 = tpu.matmul %18, %5, %cst_10 {dimension_numbers = #tpu.dot_dimension_numbers<[1], [0], [0], [1], [0, 0, 1, 1], [], []>} : vector<8x16xf32>, vector<16x8xf32>, vector<8x8xf32> -> vector<8x8xf32>
    %c0_11 = arith.constant 0 : index
    %c0_12 = arith.constant 0 : index
    %c0_13 = arith.constant 0 : index
    %20 = vector.load %arg3[%c0_11, %c0_12, %c0_13] : memref<1x8x32xf32, #tpu.memory_space<vmem>>, vector<1x8x8xf32>
    %21 = vector.shape_cast %20 : vector<1x8x8xf32> to vector<8x8xf32>
    %22 = vector.shape_cast %19 : vector<8x8xf32> to vector<1x8x8xf32>
    tpu.vector_store %arg3[%c0_11, %c0_12, %c0_13], %22 {strides = array<i32>} : memref<1x8x32xf32, #tpu.memory_space<vmem>>, vector<1x8x8xf32>,
    %c0_14 = arith.constant 0 : index
    %c0_15 = arith.constant 0 : index
    %c8 = arith.constant 8 : index
    %23 = vector.load %arg1[%c0_14, %c0_15, %c8] : memref<1x8x32xf32, #tpu.memory_space<vmem>>, vector<1x8x8xf32>
    %24 = vector.shape_cast %23 : vector<1x8x8xf32> to vector<8x8xf32>
    %c0_16 = arith.constant 0 : index
    %c0_17 = arith.constant 0 : index
    %c8_18 = arith.constant 8 : index
    %25 = vector.load %arg2[%c0_16, %c0_17, %c8_18] : memref<1x16x64xf32, #tpu.memory_space<vmem>>, vector<1x16x8xf32>
    %26 = vector.shape_cast %25 : vector<1x16x8xf32> to vector<16x8xf32>
    %c0_19 = arith.constant 0 : index
    %c0_20 = arith.constant 0 : index
    %c40 = arith.constant 40 : index
    %27 = vector.load %arg2[%c0_19, %c0_20, %c40] : memref<1x16x64xf32, #tpu.memory_space<vmem>>, vector<1x16x8xf32>
    %28 = vector.shape_cast %27 : vector<1x16x8xf32> to vector<16x8xf32>
    %cst_21 = arith.constant dense<0.000000e+00> : vector<8x16xf32>
    %29 = tpu.matmul %24, %26, %cst_21 {dimension_numbers = #tpu.dot_dimension_numbers<[1], [1], [0], [0], [0, 0, 1, 0], [], []>} : vector<8x8xf32>, vector<16x8xf32>, vector<8x16xf32> -> vector<8x16xf32>
    %cst_22 = arith.constant 0.353553385 : f32
    %30 = vector.broadcast %cst_22 : f32 to vector<8x16xf32>
    %31 = arith.mulf %29, %30 : vector<8x16xf32>
    %cst_23 = arith.constant dense<0xFF800000> : vector<8xf32>
    %32 = vector.multi_reduction <maximumf>, %31, %cst_23 [1] : vector<8x16xf32> to vector<8xf32>
    %33 = vector.shape_cast %32 : vector<8xf32> to vector<8x1xf32>
    %34 = vector.broadcast %33 : vector<8x1xf32> to vector<8x16xf32>
    %35 = arith.subf %31, %34 : vector<8x16xf32>
    %36 = math.exp %35 : vector<8x16xf32>
    %cst_24 = arith.constant dense<0.000000e+00> : vector<8xf32>
    %37 = vector.multi_reduction <add>, %36, %cst_24 [1] : vector<8x16xf32> to vector<8xf32>
    %38 = vector.shape_cast %37 : vector<8xf32> to vector<8x1xf32>
    %39 = tpu.reciprocal %38 {approx = true} : vector<8x1xf32> -> vector<8x1xf32>
    %40 = vector.broadcast %39 : vector<8x1xf32> to vector<8x16xf32>
    %41 = arith.mulf %36, %40 : vector<8x16xf32>
    %cst_25 = arith.constant dense<0.000000e+00> : vector<8x8xf32>
    %42 = tpu.matmul %41, %28, %cst_25 {dimension_numbers = #tpu.dot_dimension_numbers<[1], [0], [0], [1], [0, 0, 1, 1], [], []>} : vector<8x16xf32>, vector<16x8xf32>, vector<8x8xf32> -> vector<8x8xf32>
    %c0_26 = arith.constant 0 : index
    %c0_27 = arith.constant 0 : index
    %c8_28 = arith.constant 8 : index
    %43 = vector.load %arg3[%c0_26, %c0_27, %c8_28] : memref<1x8x32xf32, #tpu.memory_space<vmem>>, vector<1x8x8xf32>
    %44 = vector.shape_cast %43 : vector<1x8x8xf32> to vector<8x8xf32>
    %45 = vector.shape_cast %42 : vector<8x8xf32> to vector<1x8x8xf32>
    tpu.vector_store %arg3[%c0_26, %c0_27, %c8_28], %45 {strides = array<i32>} : memref<1x8x32xf32, #tpu.memory_space<vmem>>, vector<1x8x8xf32>,
    %c0_29 = arith.constant 0 : index
    %c0_30 = arith.constant 0 : index
    %c16 = arith.constant 16 : index
    %46 = vector.load %arg1[%c0_29, %c0_30, %c16] : memref<1x8x32xf32, #tpu.memory_space<vmem>>, vector<1x8x8xf32>
    %47 = vector.shape_cast %46 : vector<1x8x8xf32> to vector<8x8xf32>
    %c0_31 = arith.constant 0 : index
    %c0_32 = arith.constant 0 : index
    %c16_33 = arith.constant 16 : index
    %48 = vector.load %arg2[%c0_31, %c0_32, %c16_33] : memref<1x16x64xf32, #tpu.memory_space<vmem>>, vector<1x16x8xf32>
    %49 = vector.shape_cast %48 : vector<1x16x8xf32> to vector<16x8xf32>
    %c0_34 = arith.constant 0 : index
    %c0_35 = arith.constant 0 : index
    %c48 = arith.constant 48 : index
    %50 = vector.load %arg2[%c0_34, %c0_35, %c48] : memref<1x16x64xf32, #tpu.memory_space<vmem>>, vector<1x16x8xf32>
    %51 = vector.shape_cast %50 : vector<1x16x8xf32> to vector<16x8xf32>
    %cst_36 = arith.constant dense<0.000000e+00> : vector<8x16xf32>
    %52 = tpu.matmul %47, %49, %cst_36 {dimension_numbers = #tpu.dot_dimension_numbers<[1], [1], [0], [0], [0, 0, 1, 0], [], []>} : vector<8x8xf32>, vector<16x8xf32>, vector<8x16xf32> -> vector<8x16xf32>
    %cst_37 = arith.constant 0.353553385 : f32
    %53 = vector.broadcast %cst_37 : f32 to vector<8x16xf32>
    %54 = arith.mulf %52, %53 : vector<8x16xf32>
    %cst_38 = arith.constant dense<0xFF800000> : vector<8xf32>
    %55 = vector.multi_reduction <maximumf>, %54, %cst_38 [1] : vector<8x16xf32> to vector<8xf32>
    %56 = vector.shape_cast %55 : vector<8xf32> to vector<8x1xf32>
    %57 = vector.broadcast %56 : vector<8x1xf32> to vector<8x16xf32>
    %58 = arith.subf %54, %57 : vector<8x16xf32>
    %59 = math.exp %58 : vector<8x16xf32>
    %cst_39 = arith.constant dense<0.000000e+00> : vector<8xf32>
    %60 = vector.multi_reduction <add>, %59, %cst_39 [1] : vector<8x16xf32> to vector<8xf32>
    %61 = vector.shape_cast %60 : vector<8xf32> to vector<8x1xf32>
    %62 = tpu.reciprocal %61 {approx = true} : vector<8x1xf32> -> vector<8x1xf32>
    %63 = vector.broadcast %62 : vector<8x1xf32> to vector<8x16xf32>
    %64 = arith.mulf %59, %63 : vector<8x16xf32>
    %cst_40 = arith.constant dense<0.000000e+00> : vector<8x8xf32>
    %65 = tpu.matmul %64, %51, %cst_40 {dimension_numbers = #tpu.dot_dimension_numbers<[1], [0], [0], [1], [0, 0, 1, 1], [], []>} : vector<8x16xf32>, vector<16x8xf32>, vector<8x8xf32> -> vector<8x8xf32>
    %c0_41 = arith.constant 0 : index
    %c0_42 = arith.constant 0 : index
    %c16_43 = arith.constant 16 : index
    %66 = vector.load %arg3[%c0_41, %c0_42, %c16_43] : memref<1x8x32xf32, #tpu.memory_space<vmem>>, vector<1x8x8xf32>
    %67 = vector.shape_cast %66 : vector<1x8x8xf32> to vector<8x8xf32>
    %68 = vector.shape_cast %65 : vector<8x8xf32> to vector<1x8x8xf32>
    tpu.vector_store %arg3[%c0_41, %c0_42, %c16_43], %68 {strides = array<i32>} : memref<1x8x32xf32, #tpu.memory_space<vmem>>, vector<1x8x8xf32>,
    %c0_44 = arith.constant 0 : index
    %c0_45 = arith.constant 0 : index
    %c24 = arith.constant 24 : index
    %69 = vector.load %arg1[%c0_44, %c0_45, %c24] : memref<1x8x32xf32, #tpu.memory_space<vmem>>, vector<1x8x8xf32>
    %70 = vector.shape_cast %69 : vector<1x8x8xf32> to vector<8x8xf32>
    %c0_46 = arith.constant 0 : index
    %c0_47 = arith.constant 0 : index
    %c24_48 = arith.constant 24 : index
    %71 = vector.load %arg2[%c0_46, %c0_47, %c24_48] : memref<1x16x64xf32, #tpu.memory_space<vmem>>, vector<1x16x8xf32>
    %72 = vector.shape_cast %71 : vector<1x16x8xf32> to vector<16x8xf32>
    %c0_49 = arith.constant 0 : index
    %c0_50 = arith.constant 0 : index
    %c56 = arith.constant 56 : index
    %73 = vector.load %arg2[%c0_49, %c0_50, %c56] : memref<1x16x64xf32, #tpu.memory_space<vmem>>, vector<1x16x8xf32>
    %74 = vector.shape_cast %73 : vector<1x16x8xf32> to vector<16x8xf32>
    %cst_51 = arith.constant dense<0.000000e+00> : vector<8x16xf32>
    %75 = tpu.matmul %70, %72, %cst_51 {dimension_numbers = #tpu.dot_dimension_numbers<[1], [1], [0], [0], [0, 0, 1, 0], [], []>} : vector<8x8xf32>, vector<16x8xf32>, vector<8x16xf32> -> vector<8x16xf32>
    %cst_52 = arith.constant 0.353553385 : f32
    %76 = vector.broadcast %cst_52 : f32 to vector<8x16xf32>
    %77 = arith.mulf %75, %76 : vector<8x16xf32>
    %cst_53 = arith.constant dense<0xFF800000> : vector<8xf32>
    %78 = vector.multi_reduction <maximumf>, %77, %cst_53 [1] : vector<8x16xf32> to vector<8xf32>
    %79 = vector.shape_cast %78 : vector<8xf32> to vector<8x1xf32>
    %80 = vector.broadcast %79 : vector<8x1xf32> to vector<8x16xf32>
    %81 = arith.subf %77, %80 : vector<8x16xf32>
    %82 = math.exp %81 : vector<8x16xf32>
    %cst_54 = arith.constant dense<0.000000e+00> : vector<8xf32>
    %83 = vector.multi_reduction <add>, %82, %cst_54 [1] : vector<8x16xf32> to vector<8xf32>
    %84 = vector.shape_cast %83 : vector<8xf32> to vector<8x1xf32>
    %85 = tpu.reciprocal %84 {approx = true} : vector<8x1xf32> -> vector<8x1xf32>
    %86 = vector.broadcast %85 : vector<8x1xf32> to vector<8x16xf32>
    %87 = arith.mulf %82, %86 : vector<8x16xf32>
    %cst_55 = arith.constant dense<0.000000e+00> : vector<8x8xf32>
    %88 = tpu.matmul %87, %74, %cst_55 {dimension_numbers = #tpu.dot_dimension_numbers<[1], [0], [0], [1], [0, 0, 1, 1], [], []>} : vector<8x16xf32>, vector<16x8xf32>, vector<8x8xf32> -> vector<8x8xf32>
    %c0_56 = arith.constant 0 : index
    %c0_57 = arith.constant 0 : index
    %c24_58 = arith.constant 24 : index
    %89 = vector.load %arg3[%c0_56, %c0_57, %c24_58] : memref<1x8x32xf32, #tpu.memory_space<vmem>>, vector<1x8x8xf32>
    %90 = vector.shape_cast %89 : vector<1x8x8xf32> to vector<8x8xf32>
    %91 = vector.shape_cast %88 : vector<8x8xf32> to vector<1x8x8xf32>
    tpu.vector_store %arg3[%c0_56, %c0_57, %c24_58], %91 {strides = array<i32>} : memref<1x8x32xf32, #tpu.memory_space<vmem>>, vector<1x8x8xf32>,
    return
  }
  func.func @transform_0(%arg0: i32) -> (i32, i32, i32) {
    %c0_i32 = arith.constant 0 : i32
    %c0_i32_0 = arith.constant 0 : i32
    %c0_i32_1 = arith.constant 0 : i32
    return %arg0, %c0_i32, %c0_i32_0 : i32, i32, i32
  }
  func.func @transform_1(%arg0: i32) -> (i32, i32, i32) {
    %c0_i32 = arith.constant 0 : i32
    %c0_i32_0 = arith.constant 0 : i32
    %c0_i32_1 = arith.constant 0 : i32
    return %arg0, %c0_i32, %c0_i32_0 : i32, i32, i32
  }
  func.func @transform_2(%arg0: i32) -> (i32, i32, i32) {
    %c0_i32 = arith.constant 0 : i32
    %c0_i32_0 = arith.constant 0 : i32
    %c0_i32_1 = arith.constant 0 : i32
    return %arg0, %c0_i32, %c0_i32_0 : i32, i32, i32
  }
}

module attributes {stable_mosaic.version = 11 : i64} {
  func.func @_linear_kernel(%arg0: i32, %arg1: i32, %arg2: i32, %arg3: memref<16x32xf32, #tpu.memory_space<vmem>>, %arg4: memref<32x32xf32, #tpu.memory_space<vmem>>, %arg5: memref<1x32xf32, #tpu.memory_space<vmem>>, %arg6: memref<16x32xf32, #tpu.memory_space<vmem>>, %arg7: memref<16x32xf32, #tpu.memory_space<vmem>>) attributes {dimension_semantics = [#tpu.dimension_semantics<parallel>, #tpu.dimension_semantics<parallel>, #tpu.dimension_semantics<arbitrary>], iteration_bounds = array<i64: 1, 1, 1>, scalar_prefetch = 0 : i64, scratch_operands = 1 : i64, tpu.core_type = #tpu.core_type<tc>, window_params = [{transform_indices = @transform_0, window_bounds = array<i64: 16, 32>}, {transform_indices = @transform_1, window_bounds = array<i64: 32, 32>}, {transform_indices = @transform_2, window_bounds = array<i64: 1, 32>}, {transform_indices = @transform_3, window_bounds = array<i64: 16, 32>}]} {
    %c0_i32 = arith.constant 0 : i32
    %0 = arith.cmpi eq, %arg2, %c0_i32 : i32
    %1 = arith.extui %0 : i1 to i32
    %c0_i32_0 = arith.constant 0 : i32
    %2 = arith.cmpi ne, %1, %c0_i32_0 : i32
    scf.if %2 {
      %cst_10 = arith.constant 0.000000e+00 : f32
      %12 = vector.broadcast %cst_10 : f32 to vector<16x32xf32>
      %c0_11 = arith.constant 0 : index
      %c0_12 = arith.constant 0 : index
      %13 = vector.load %arg7[%c0_11, %c0_12] : memref<16x32xf32, #tpu.memory_space<vmem>>, vector<16x32xf32>
      tpu.vector_store %arg7[%c0_11, %c0_12], %12 {strides = array<i32>} : memref<16x32xf32, #tpu.memory_space<vmem>>, vector<16x32xf32>,
    } else {
    }
    %c0 = arith.constant 0 : index
    %c0_1 = arith.constant 0 : index
    %3 = vector.load %arg7[%c0, %c0_1] : memref<16x32xf32, #tpu.memory_space<vmem>>, vector<16x32xf32>
    %c0_2 = arith.constant 0 : index
    %c0_3 = arith.constant 0 : index
    %4 = vector.load %arg3[%c0_2, %c0_3] : memref<16x32xf32, #tpu.memory_space<vmem>>, vector<16x32xf32>
    %c0_4 = arith.constant 0 : index
    %c0_5 = arith.constant 0 : index
    %5 = vector.load %arg4[%c0_4, %c0_5] : memref<32x32xf32, #tpu.memory_space<vmem>>, vector<32x32xf32>
    %cst = arith.constant dense<0.000000e+00> : vector<16x32xf32>
    %6 = tpu.matmul %4, %5, %cst {dimension_numbers = #tpu.dot_dimension_numbers<[1], [0], [0], [1], [0, 0, 1, 1], [], []>} : vector<16x32xf32>, vector<32x32xf32>, vector<16x32xf32> -> vector<16x32xf32>
    %7 = arith.addf %3, %6 : vector<16x32xf32>
    %c0_6 = arith.constant 0 : index
    %c0_7 = arith.constant 0 : index
    %8 = vector.load %arg7[%c0_6, %c0_7] : memref<16x32xf32, #tpu.memory_space<vmem>>, vector<16x32xf32>
    tpu.vector_store %arg7[%c0_6, %c0_7], %7 {strides = array<i32>} : memref<16x32xf32, #tpu.memory_space<vmem>>, vector<16x32xf32>,
    %c0_i32_8 = arith.constant 0 : i32
    %9 = arith.cmpi eq, %arg2, %c0_i32_8 : i32
    %10 = arith.extui %9 : i1 to i32
    %c0_i32_9 = arith.constant 0 : i32
    %11 = arith.cmpi ne, %10, %c0_i32_9 : i32
    scf.if %11 {
      %c0_10 = arith.constant 0 : index
      %c0_11 = arith.constant 0 : index
      %12 = vector.load %arg7[%c0_10, %c0_11] : memref<16x32xf32, #tpu.memory_space<vmem>>, vector<16x32xf32>
      %c0_12 = arith.constant 0 : index
      %c0_13 = arith.constant 0 : index
      %13 = vector.load %arg5[%c0_12, %c0_13] : memref<1x32xf32, #tpu.memory_space<vmem>>, vector<1x32xf32>
      %14 = vector.broadcast %13 : vector<1x32xf32> to vector<16x32xf32>
      %15 = arith.addf %12, %14 : vector<16x32xf32>
      %c0_14 = arith.constant 0 : index
      %c0_15 = arith.constant 0 : index
      %16 = vector.load %arg6[%c0_14, %c0_15] : memref<16x32xf32, #tpu.memory_space<vmem>>, vector<16x32xf32>
      tpu.vector_store %arg6[%c0_14, %c0_15], %15 {strides = array<i32>} : memref<16x32xf32, #tpu.memory_space<vmem>>, vector<16x32xf32>,
    } else {
    }
    return
  }
  func.func @transform_0(%arg0: i32, %arg1: i32, %arg2: i32) -> (i32, i32) {
    %c0_i32 = arith.constant 0 : i32
    return %arg0, %arg2 : i32, i32
  }
  func.func @transform_1(%arg0: i32, %arg1: i32, %arg2: i32) -> (i32, i32) {
    %c0_i32 = arith.constant 0 : i32
    return %arg2, %arg1 : i32, i32
  }
  func.func @transform_2(%arg0: i32, %arg1: i32, %arg2: i32) -> (i32, i32) {
    %c0_i32 = arith.constant 0 : i32
    %c0_i32_0 = arith.constant 0 : i32
    return %c0_i32, %arg1 : i32, i32
  }
  func.func @transform_3(%arg0: i32, %arg1: i32, %arg2: i32) -> (i32, i32) {
    %c0_i32 = arith.constant 0 : i32
    return %arg0, %arg1 : i32, i32
  }
}

</mosaic_0001>

<llo_original>
// kernel: attention_forward.7
$region0: #{attention_forward.7}
  #allocation0 [shape = 'u32[]', space=smem, size = 0x4, offset = 0x4, fixed_abs, tag = 'smem constant byte address 0x4 - core index']
  #allocation1 [shape = 'u32[144,128]{1,0:T(1,128)}', space=vmem, size = 0x12000, scoped, tag = 'internal scratch']
  #allocation2 [shape = 'f32[16,32]{1,0:T(8,128)}', space=vmem, size = 0x2000, scoped, tag = 'scratch operand']
  %s0 = inlined_call_operand.vmem [shape: f32[16,32], index: 0, kind: input, shape index: {}]
  %s1 = inlined_call_operand.vmem [shape: f32[32,32], index: 1, kind: input, shape index: {}]
  %s2 = inlined_call_operand.vmem [shape: f32[1,32], index: 2, kind: input, shape index: {}]
  %s3 = inlined_call_operand.hbm [shape: f32[16,32], index: 3, kind: output, shape index: {}]
  %s4 = sld [smem:[#allocation0]]
  $region30: #{attention_forward.7} parent=0
    _
  %s6 = ssub.s32 1, %s4
  %s7 = scalar_select 0, %s6, %s4
  $region1: #{attention_forward.7} parent=0
    #allocation3 [shape = 'u8[8192]{0}', space=vmem, size = 0x2000, scoped, tag = 'output window, operand 0, single buffered']
    #allocation4 [shape = 's32[1]{0}', space=sflag, size = 0x4, scoped, tag = 'scoped memory for attention_forward.7']
    %8 = vsyncpa [#allocation4], 0
    // Predicated region
    $region2: #{attention_forward.7} parent=1 // pred_check
      _
    $region3: #{attention_forward.7} parent=1 // pred_check_branch
      %10 = sbr.rel (0) target = $region5
    $region4: #{attention_forward.7} parent=1 // pred_region
      _
    $region5: #{attention_forward.7} parent=1 // pred_fallthru
      _
    // Predicated region
    $region6: #{attention_forward.7} parent=1 // pred_check
      _
    $region7: #{attention_forward.7} parent=1 // pred_check_branch
      %12 = sbr.rel (0) target = $region9
    $region8: #{attention_forward.7} parent=1 // pred_region
      _
    $region9: #{attention_forward.7} parent=1 // pred_fallthru
      _
    // Predicated region
    $region10: #{attention_forward.7} parent=1 // pred_check
      _
    $region11: #{attention_forward.7} parent=1 // pred_check_branch
      %14 = sbr.rel (0) target = $region13
    $region12: #{attention_forward.7} parent=1 // pred_region
      _
    $region13: #{attention_forward.7} parent=1 // pred_fallthru
      _
    %p15 = scmp.eq.s32.totalorder 0, 0
    // Predicated region
    $region14: #{attention_forward.7} parent=1 // pred_check
      %p16 = pneg %p15
    $region15: #{attention_forward.7} parent=1 // pred_check_branch
      %18 = sbr.rel (%p16) target = $region17
    $region16: #{attention_forward.7} parent=1 // pred_region
      %vm19 = vcmask 261120
      %20 = vst.msk [vmem:[#allocation2] sm:$0xff] %vm19, 0.0
      %21 = vst.msk [vmem:[#allocation2 + $0x8] sm:$0xff] %vm19, 0.0
    $region17: #{attention_forward.7} parent=1 // pred_fallthru
      _
    %v22 = vld [vmem:[#allocation2] sm:$0xff]
    %v23 = vld [vmem:[#allocation2 + $0x8] sm:$0xff]
    %v24 = vld [vmem:[%s0] sm:$0xff]
    %v25 = vld [vmem:[%s0 + $0x8] sm:$0xff]
    %v26 = vld [vmem:[%s1] sm:$0xff]
    %v27 = vld [vmem:[%s1 + $0x8] sm:$0xff]
    %v28 = vld [vmem:[%s1 + $0x10] sm:$0xff]
    %v29 = vld [vmem:[%s1 + $0x18] sm:$0xff]
    %vm30 = vcmask 261120
    %v32 = vsel %vm30, %v24, 0
    %v35 = vsel %vm30, %v25, 0
    %37 = vmatprep.subr.mxu0 0.0
    %38 = vmatpush1.msra.mxu0 0.0
    %39 = vmatprep.subr.mxu0 0.0
    %40 = vmatpush1.msra.mxu0 0.0
    %41 = vmatprep.subr.mxu0 0.0
    %42 = vmatpush1.msra.mxu0 0.0
    %43 = vmatprep.subr.mxu0 0.0
    %44 = vmatpush1.msra.mxu0 0.0
    %45 = vmatprep.subr.mxu0 0.0
    %46 = vmatpush1.msra.mxu0 0.0
    %47 = vmatprep.subr.mxu0 0.0
    %48 = vmatpush1.msra.mxu0 0.0
    %49 = vmatprep.subr.mxu0 0.0
    %50 = vmatpush1.msra.mxu0 0.0
    %51 = vmatprep.subr.mxu0 0.0
    %52 = vmatpush1.msra.mxu0 0.0
    %53 = vmatprep.subr.mxu0 0.0
    %54 = vmatpush1.msra.mxu0 0.0
    %55 = vmatprep.subr.mxu0 0.0
    %56 = vmatpush1.msra.mxu0 0.0
    %57 = vmatprep.subr.mxu0 0.0
    %58 = vmatpush1.msra.mxu0 0.0
    %59 = vmatprep.subr.mxu0 0.0
    %60 = vmatpush1.msra.mxu0 0.0
    %61 = vmatprep.subr.mxu0 0.0
    %62 = vmatpush1.msra.mxu0 %v29
    %63 = vmatprep.subr.mxu0 0.0
    %64 = vmatpush1.msra.mxu0 %v28
    %65 = vmatprep.subr.mxu0 0.0
    %66 = vmatpush1.msra.mxu0 %v27
    %67 = vmatprep.subr.mxu0 0.0
    %68 = vmatpush1.msra.mxu0 %v26
    %69 = vmatprep.subr.mxu0 0.0
    %70 = vmatpush2.msra.mxu0 0.0
    %71 = vmatprep.subr.mxu0 0.0
    %72 = vmatpush2.msra.mxu0 0.0
    %73 = vmatprep.subr.mxu0 0.0
    %74 = vmatpush2.msra.mxu0 0.0
    %75 = vmatprep.subr.mxu0 0.0
    %76 = vmatpush2.msra.mxu0 0.0
    %77 = vmatprep.subr.mxu0 0.0
    %78 = vmatpush2.msra.mxu0 0.0
    %79 = vmatprep.subr.mxu0 0.0
    %80 = vmatpush2.msra.mxu0 0.0
    %81 = vmatprep.subr.mxu0 0.0
    %82 = vmatpush2.msra.mxu0 0.0
    %83 = vmatprep.subr.mxu0 0.0
    %84 = vmatpush2.msra.mxu0 0.0
    %85 = vmatprep.subr.mxu0 0.0
    %86 = vmatpush2.msra.mxu0 0.0
    %87 = vmatprep.subr.mxu0 0.0
    %88 = vmatpush2.msra.mxu0 0.0
    %89 = vmatprep.subr.mxu0 0.0
    %90 = vmatpush2.msra.mxu0 0.0
    %91 = vmatprep.subr.mxu0 0.0
    %92 = vmatpush2.msra.mxu0 0.0
    %93 = vmatprep.subr.mxu0 0.0
    %94 = vmatpush2.msra.mxu0 0.0
    %95 = vmatprep.subr.mxu0 0.0
    %96 = vmatpush2.msra.mxu0 0.0
    %97 = vmatprep.subr.mxu0 0.0
    %98 = vmatpush2.msra.mxu0 0.0
    %99 = vmatprep.subr.mxu0 0.0
    %100 = vmatpush2.msra.mxu0 0.0
    %101 = vmatprep.mubr.f32.mxu0 0.0
    %102 = vmatmul.mubr.f32.gmra.mxu0 %v32
    %v103 = vpop.f32.mrf.mxu0
    %v104 = vadd.f32 0.0, %v103
    %v105 = vpop.f32.mrf.mxu0
    %106 = vmatprep.mubr.f32.mxu0 0.0
    %107 = vmatmul.mubr.f32.gmra.mxu0 %v35
    %v108 = vpop.f32.mrf.mxu0
    %v109 = vadd.f32 0.0, %v108
    %v110 = vpop.f32.mrf.mxu0
    %111 = vdwg.mxu0
    %v112 = vadd.f32 %v22, %v104
    %v113 = vadd.f32 %v23, %v109
    %114 = vst.msk [vmem:[#allocation2] sm:$0xff] %vm30, %v112
    %115 = vst.msk [vmem:[#allocation2 + $0x8] sm:$0xff] %vm30, %v113
    // Predicated region
    $region18: #{attention_forward.7} parent=1 // pred_check
      %p116 = pneg %p15
    $region19: #{attention_forward.7} parent=1 // pred_check_branch
      %118 = sbr.rel (%p116) target = $region21
    $region20: #{attention_forward.7} parent=1 // pred_region
      %v119 = vld [vmem:[#allocation2] sm:$0xff]
      %v120 = vld [vmem:[#allocation2 + $0x8] sm:$0xff]
      %v121 = vld [vmem:[%s2] sm:$0x1]
      %v123 = vlaneseq
      %v124 = vshrl.u32 %v123, 7
      %v125 = vsub.s32 0, %v124
      %v126 = vrot.slane %v121, %v125
      %v128 = vadd.f32 %v119, %v126
      %v129 = vadd.f32 %v120, %v126
      %130 = vst.msk [vmem:[#allocation3] sm:$0xff] %vm30, %v128
      %131 = vst.msk [vmem:[#allocation3 + $0x8] sm:$0xff] %vm30, %v129
    $region21: #{attention_forward.7} parent=1 // pred_fallthru
      _
    // Predicated region
    $region22: #{attention_forward.7} parent=1 // pred_check
      _
    $region23: #{attention_forward.7} parent=1 // pred_check_branch
      %133 = sbr.rel (0) target = $region25
    $region24: #{attention_forward.7} parent=1 // pred_region
      %s135 = ssub.s32 256, 256
      %136 = vsyncadd [#allocation4], %s135
      %s137 = sshll.u32 [#allocation3], 4
      %s138 = int_to_ptr.vmem [resolvable:$true] %s137
      %143 = dma.vmem_to_hbm [thread:$0]  %s138, 256, %s3, [#allocation4], 128, 128, 8
    $region25: #{attention_forward.7} parent=1 // pred_fallthru
      _
    // Predicated region
    $region26: #{attention_forward.7} parent=1 // pred_check
      _
    $region27: #{attention_forward.7} parent=1 // pred_check_branch
      %145 = sbr.rel (0) target = $region29
    $region28: #{attention_forward.7} parent=1 // pred_region
      %146 = dma.done [#allocation4], 256
    $region29: #{attention_forward.7} parent=1 // pred_fallthru
      _
    %147 = vsyncpa [#allocation4], 1

// kernel: attention_forward.5
$region0: #{attention_forward.5}
  #allocation0 [shape = 'u32[]', space=smem, size = 0x4, offset = 0x4, fixed_abs, tag = 'smem constant byte address 0x4 - core index']
  #allocation1 [shape = 'u32[144,128]{1,0:T(1,128)}', space=vmem, size = 0x12000, scoped, tag = 'internal scratch']
  #allocation2 [shape = 'f32[16,32]{1,0:T(8,128)}', space=vmem, size = 0x2000, scoped, tag = 'scratch operand']
  %s0 = inlined_call_operand.hbm [shape: f32[16,32], index: 0, kind: input, shape index: {}]
  %s1 = inlined_call_operand.hbm [shape: f32[32,32], index: 1, kind: input, shape index: {}]
  %s2 = inlined_call_operand.vmem [shape: f32[1,32], index: 2, kind: input, shape index: {}]
  %s3 = inlined_call_operand.vmem [shape: f32[16,32], index: 3, kind: output, shape index: {}]
  %s4 = sld [smem:[#allocation0]]
  $region38: #{attention_forward.5} parent=0
    _
  %s6 = ssub.s32 1, %s4
  %s7 = scalar_select 0, %s6, %s4
  $region1: #{attention_forward.5} parent=0
    #allocation3 [shape = 'u8[8192]{0}', space=vmem, size = 0x2000, scoped, tag = 'input window, operand 0, single buffered']
    #allocation4 [shape = 's32[1]{0}', space=sflag, size = 0x4, scoped, tag = 'scoped memory for attention_forward.5']
    #allocation5 [shape = 'u8[16384]{0}', space=vmem, size = 0x4000, scoped, tag = 'input window, operand 1, single buffered']
    #allocation6 [shape = 's32[1]{0}', space=sflag, size = 0x4, scoped, tag = 'scoped memory for attention_forward.5']
    %8 = vsyncpa [#allocation4], 0
    %9 = vsyncpa [#allocation6], 0
    // Predicated region
    $region2: #{attention_forward.5} parent=1 // pred_check
      _
    $region3: #{attention_forward.5} parent=1 // pred_check_branch
      %11 = sbr.rel (0) target = $region5
    $region4: #{attention_forward.5} parent=1 // pred_region
      %s13 = ssub.s32 256, 256
      %14 = vsyncadd [#allocation4], %s13
      %s15 = sshll.u32 [#allocation3], 4
      %s16 = int_to_ptr.vmem [resolvable:$true] %s15
      %21 = dma.hbm_to_vmem [thread:$0]  %s0, 256, %s16, [#allocation4], 128, 128, 8
    $region5: #{attention_forward.5} parent=1 // pred_fallthru
      _
    // Predicated region
    $region6: #{attention_forward.5} parent=1 // pred_check
      _
    $region7: #{attention_forward.5} parent=1 // pred_check_branch
      %23 = sbr.rel (0) target = $region9
    $region8: #{attention_forward.5} parent=1 // pred_region
      %s25 = ssub.s32 512, 512
      %26 = vsyncadd [#allocation6], %s25
      %s27 = sshll.u32 [#allocation5], 4
      %s28 = int_to_ptr.vmem [resolvable:$true] %s27
      %33 = dma.hbm_to_vmem [thread:$0]  %s1, 512, %s28, [#allocation6], 128, 128, 8
    $region9: #{attention_forward.5} parent=1 // pred_fallthru
      _
    // Predicated region
    $region10: #{attention_forward.5} parent=1 // pred_check
      _
    $region11: #{attention_forward.5} parent=1 // pred_check_branch
      %35 = sbr.rel (0) target = $region13
    $region12: #{attention_forward.5} parent=1 // pred_region
      _
    $region13: #{attention_forward.5} parent=1 // pred_fallthru
      _
    // Predicated region
    $region14: #{attention_forward.5} parent=1 // pred_check
      _
    $region15: #{attention_forward.5} parent=1 // pred_check_branch
      %37 = sbr.rel (0) target = $region17
    $region16: #{attention_forward.5} parent=1 // pred_region
      %38 = dma.done [#allocation4], 256
    $region17: #{attention_forward.5} parent=1 // pred_fallthru
      _
    // Predicated region
    $region18: #{attention_forward.5} parent=1 // pred_check
      _
    $region19: #{attention_forward.5} parent=1 // pred_check_branch
      %40 = sbr.rel (0) target = $region21
    $region20: #{attention_forward.5} parent=1 // pred_region
      %41 = dma.done [#allocation6], 512
    $region21: #{attention_forward.5} parent=1 // pred_fallthru
      _
    %p42 = scmp.eq.s32.totalorder 0, 0
    // Predicated region
    $region22: #{attention_forward.5} parent=1 // pred_check
      %p43 = pneg %p42
    $region23: #{attention_forward.5} parent=1 // pred_check_branch
      %45 = sbr.rel (%p43) target = $region25
    $region24: #{attention_forward.5} parent=1 // pred_region
      %vm46 = vcmask 261120
      %47 = vst.msk [vmem:[#allocation2] sm:$0xff] %vm46, 0.0
      %48 = vst.msk [vmem:[#allocation2 + $0x8] sm:$0xff] %vm46, 0.0
    $region25: #{attention_forward.5} parent=1 // pred_fallthru
      _
    %v49 = vld [vmem:[#allocation2] sm:$0xff]
    %v50 = vld [vmem:[#allocation2 + $0x8] sm:$0xff]
    %v51 = vld [vmem:[#allocation3] sm:$0xff]
    %v52 = vld [vmem:[#allocation3 + $0x8] sm:$0xff]
    %v53 = vld [vmem:[#allocation5] sm:$0xff]
    %v54 = vld [vmem:[#allocation5 + $0x8] sm:$0xff]
    %v55 = vld [vmem:[#allocation5 + $0x10] sm:$0xff]
    %v56 = vld [vmem:[#allocation5 + $0x18] sm:$0xff]
    %vm57 = vcmask 261120
    %v59 = vsel %vm57, %v51, 0
    %v62 = vsel %vm57, %v52, 0
    %64 = vmatprep.subr.mxu0 0.0
    %65 = vmatpush1.msra.mxu0 0.0
    %66 = vmatprep.subr.mxu0 0.0
    %67 = vmatpush1.msra.mxu0 0.0
    %68 = vmatprep.subr.mxu0 0.0
    %69 = vmatpush1.msra.mxu0 0.0
    %70 = vmatprep.subr.mxu0 0.0
    %71 = vmatpush1.msra.mxu0 0.0
    %72 = vmatprep.subr.mxu0 0.0
    %73 = vmatpush1.msra.mxu0 0.0
    %74 = vmatprep.subr.mxu0 0.0
    %75 = vmatpush1.msra.mxu0 0.0
    %76 = vmatprep.subr.mxu0 0.0
    %77 = vmatpush1.msra.mxu0 0.0
    %78 = vmatprep.subr.mxu0 0.0
    %79 = vmatpush1.msra.mxu0 0.0
    %80 = vmatprep.subr.mxu0 0.0
    %81 = vmatpush1.msra.mxu0 0.0
    %82 = vmatprep.subr.mxu0 0.0
    %83 = vmatpush1.msra.mxu0 0.0
    %84 = vmatprep.subr.mxu0 0.0
    %85 = vmatpush1.msra.mxu0 0.0
    %86 = vmatprep.subr.mxu0 0.0
    %87 = vmatpush1.msra.mxu0 0.0
    %88 = vmatprep.subr.mxu0 0.0
    %89 = vmatpush1.msra.mxu0 %v56
    %90 = vmatprep.subr.mxu0 0.0
    %91 = vmatpush1.msra.mxu0 %v55
    %92 = vmatprep.subr.mxu0 0.0
    %93 = vmatpush1.msra.mxu0 %v54
    %94 = vmatprep.subr.mxu0 0.0
    %95 = vmatpush1.msra.mxu0 %v53
    %96 = vmatprep.subr.mxu0 0.0
    %97 = vmatpush2.msra.mxu0 0.0
    %98 = vmatprep.subr.mxu0 0.0
    %99 = vmatpush2.msra.mxu0 0.0
    %100 = vmatprep.subr.mxu0 0.0
    %101 = vmatpush2.msra.mxu0 0.0
    %102 = vmatprep.subr.mxu0 0.0
    %103 = vmatpush2.msra.mxu0 0.0
    %104 = vmatprep.subr.mxu0 0.0
    %105 = vmatpush2.msra.mxu0 0.0
    %106 = vmatprep.subr.mxu0 0.0
    %107 = vmatpush2.msra.mxu0 0.0
    %108 = vmatprep.subr.mxu0 0.0
    %109 = vmatpush2.msra.mxu0 0.0
    %110 = vmatprep.subr.mxu0 0.0
    %111 = vmatpush2.msra.mxu0 0.0
    %112 = vmatprep.subr.mxu0 0.0
    %113 = vmatpush2.msra.mxu0 0.0
    %114 = vmatprep.subr.mxu0 0.0
    %115 = vmatpush2.msra.mxu0 0.0
    %116 = vmatprep.subr.mxu0 0.0
    %117 = vmatpush2.msra.mxu0 0.0
    %118 = vmatprep.subr.mxu0 0.0
    %119 = vmatpush2.msra.mxu0 0.0
    %120 = vmatprep.subr.mxu0 0.0
    %121 = vmatpush2.msra.mxu0 0.0
    %122 = vmatprep.subr.mxu0 0.0
    %123 = vmatpush2.msra.mxu0 0.0
    %124 = vmatprep.subr.mxu0 0.0
    %125 = vmatpush2.msra.mxu0 0.0
    %126 = vmatprep.subr.mxu0 0.0
    %127 = vmatpush2.msra.mxu0 0.0
    %128 = vmatprep.mubr.f32.mxu0 0.0
    %129 = vmatmul.mubr.f32.gmra.mxu0 %v59
    %v130 = vpop.f32.mrf.mxu0
    %v131 = vadd.f32 0.0, %v130
    %v132 = vpop.f32.mrf.mxu0
    %133 = vmatprep.mubr.f32.mxu0 0.0
    %134 = vmatmul.mubr.f32.gmra.mxu0 %v62
    %v135 = vpop.f32.mrf.mxu0
    %v136 = vadd.f32 0.0, %v135
    %v137 = vpop.f32.mrf.mxu0
    %138 = vdwg.mxu0
    %v139 = vadd.f32 %v49, %v131
    %v140 = vadd.f32 %v50, %v136
    %141 = vst.msk [vmem:[#allocation2] sm:$0xff] %vm57, %v139
    %142 = vst.msk [vmem:[#allocation2 + $0x8] sm:$0xff] %vm57, %v140
    // Predicated region
    $region26: #{attention_forward.5} parent=1 // pred_check
      %p143 = pneg %p42
    $region27: #{attention_forward.5} parent=1 // pred_check_branch
      %145 = sbr.rel (%p143) target = $region29
    $region28: #{attention_forward.5} parent=1 // pred_region
      %v146 = vld [vmem:[#allocation2] sm:$0xff]
      %v147 = vld [vmem:[#allocation2 + $0x8] sm:$0xff]
      %v148 = vld [vmem:[%s2] sm:$0x1]
      %v150 = vlaneseq
      %v151 = vshrl.u32 %v150, 7
      %v152 = vsub.s32 0, %v151
      %v153 = vrot.slane %v148, %v152
      %v155 = vadd.f32 %v146, %v153
      %v156 = vadd.f32 %v147, %v153
      %157 = vst.msk [vmem:[%s3] sm:$0xff] %vm57, %v155
      %158 = vst.msk [vmem:[%s3 + $0x8] sm:$0xff] %vm57, %v156
    $region29: #{attention_forward.5} parent=1 // pred_fallthru
      _
    // Predicated region
    $region30: #{attention_forward.5} parent=1 // pred_check
      _
    $region31: #{attention_forward.5} parent=1 // pred_check_branch
      %160 = sbr.rel (0) target = $region33
    $region32: #{attention_forward.5} parent=1 // pred_region
      _
    $region33: #{attention_forward.5} parent=1 // pred_fallthru
      _
    // Predicated region
    $region34: #{attention_forward.5} parent=1 // pred_check
      _
    $region35: #{attention_forward.5} parent=1 // pred_check_branch
      %162 = sbr.rel (0) target = $region37
    $region36: #{attention_forward.5} parent=1 // pred_region
      _
    $region37: #{attention_forward.5} parent=1 // pred_fallthru
      _
    %163 = vsyncpa [#allocation4], 1
    %164 = vsyncpa [#allocation6], 1

// kernel: attention_forward.4
$region0: #{attention_forward.4}
  #allocation0 [shape = 'u32[]', space=smem, size = 0x4, offset = 0x4, fixed_abs, tag = 'smem constant byte address 0x4 - core index']
  #allocation1 [shape = 'u32[144,128]{1,0:T(1,128)}', space=vmem, size = 0x12000, scoped, tag = 'internal scratch']
  #allocation2 [shape = 'f32[32,64]{1,0:T(8,128)}', space=vmem, size = 0x4000, scoped, tag = 'scratch operand']
  %s0 = inlined_call_operand.vmem [shape: f32[32,32], index: 0, kind: input, shape index: {}]
  %s1 = inlined_call_operand.vmem [shape: f32[32,64], index: 1, kind: input, shape index: {}]
  %s2 = inlined_call_operand.vmem [shape: f32[1,64], index: 2, kind: input, shape index: {}]
  %s3 = inlined_call_operand.vmem [shape: f32[32,64], index: 3, kind: output, shape index: {}]
  %s4 = sld [smem:[#allocation0]]
  $region30: #{attention_forward.4} parent=0
    _
  %s6 = ssub.s32 1, %s4
  %s7 = scalar_select 0, %s6, %s4
  // Predicated region
  $region2: #{attention_forward.4} parent=0 // pred_check
    _
  $region3: #{attention_forward.4} parent=0 // pred_check_branch
    %9 = sbr.rel (0) target = $region5
  $region4: #{attention_forward.4} parent=0 // pred_region
    _
  $region5: #{attention_forward.4} parent=0 // pred_fallthru
    _
  // Predicated region
  $region6: #{attention_forward.4} parent=0 // pred_check
    _
  $region7: #{attention_forward.4} parent=0 // pred_check_branch
    %11 = sbr.rel (0) target = $region9
  $region8: #{attention_forward.4} parent=0 // pred_region
    _
  $region9: #{attention_forward.4} parent=0 // pred_fallthru
    _
  // Predicated region
  $region10: #{attention_forward.4} parent=0 // pred_check
    _
  $region11: #{attention_forward.4} parent=0 // pred_check_branch
    %13 = sbr.rel (0) target = $region13
  $region12: #{attention_forward.4} parent=0 // pred_region
    _
  $region13: #{attention_forward.4} parent=0 // pred_fallthru
    _
  %p14 = scmp.eq.s32.totalorder 0, 0
  // Predicated region
  $region14: #{attention_forward.4} parent=0 // pred_check
    %p15 = pneg %p14
  $region15: #{attention_forward.4} parent=0 // pred_check_branch
    %17 = sbr.rel (%p15) target = $region17
  $region16: #{attention_forward.4} parent=0 // pred_region
    %vm18 = vcmask 523264
    %19 = vst.msk [vmem:[#allocation2] sm:$0xff] %vm18, 0.0
    %20 = vst.msk [vmem:[#allocation2 + $0x8] sm:$0xff] %vm18, 0.0
    %21 = vst.msk [vmem:[#allocation2 + $0x10] sm:$0xff] %vm18, 0.0
    %22 = vst.msk [vmem:[#allocation2 + $0x18] sm:$0xff] %vm18, 0.0
  $region17: #{attention_forward.4} parent=0 // pred_fallthru
    _
  %v23 = vld [vmem:[#allocation2] sm:$0xff]
  %v24 = vld [vmem:[#allocation2 + $0x8] sm:$0xff]
  %v25 = vld [vmem:[#allocation2 + $0x10] sm:$0xff]
  %v26 = vld [vmem:[#allocation2 + $0x18] sm:$0xff]
  %v27 = vld [vmem:[%s0] sm:$0xff]
  %v28 = vld [vmem:[%s0 + $0x8] sm:$0xff]
  %v29 = vld [vmem:[%s0 + $0x10] sm:$0xff]
  %v30 = vld [vmem:[%s0 + $0x18] sm:$0xff]
  %v31 = vld [vmem:[%s1] sm:$0xff]
  %v32 = vld [vmem:[%s1 + $0x8] sm:$0xff]
  %v33 = vld [vmem:[%s1 + $0x10] sm:$0xff]
  %v34 = vld [vmem:[%s1 + $0x18] sm:$0xff]
  %vm35 = vcmask 261120
  %v37 = vsel %vm35, %v27, 0
  %v40 = vsel %vm35, %v28, 0
  %v43 = vsel %vm35, %v29, 0
  %v46 = vsel %vm35, %v30, 0
  %48 = vmatprep.subr.mxu0 0.0
  %49 = vmatpush1.msra.mxu0 0.0
  %50 = vmatprep.subr.mxu0 0.0
  %51 = vmatpush1.msra.mxu0 0.0
  %52 = vmatprep.subr.mxu0 0.0
  %53 = vmatpush1.msra.mxu0 0.0
  %54 = vmatprep.subr.mxu0 0.0
  %55 = vmatpush1.msra.mxu0 0.0
  %56 = vmatprep.subr.mxu0 0.0
  %57 = vmatpush1.msra.mxu0 0.0
  %58 = vmatprep.subr.mxu0 0.0
  %59 = vmatpush1.msra.mxu0 0.0
  %60 = vmatprep.subr.mxu0 0.0
  %61 = vmatpush1.msra.mxu0 0.0
  %62 = vmatprep.subr.mxu0 0.0
  %63 = vmatpush1.msra.mxu0 0.0
  %64 = vmatprep.subr.mxu0 0.0
  %65 = vmatpush1.msra.mxu0 0.0
  %66 = vmatprep.subr.mxu0 0.0
  %67 = vmatpush1.msra.mxu0 0.0
  %68 = vmatprep.subr.mxu0 0.0
  %69 = vmatpush1.msra.mxu0 0.0
  %70 = vmatprep.subr.mxu0 0.0
  %71 = vmatpush1.msra.mxu0 0.0
  %72 = vmatprep.subr.mxu0 0.0
  %73 = vmatpush1.msra.mxu0 %v34
  %74 = vmatprep.subr.mxu0 0.0
  %75 = vmatpush1.msra.mxu0 %v33
  %76 = vmatprep.subr.mxu0 0.0
  %77 = vmatpush1.msra.mxu0 %v32
  %78 = vmatprep.subr.mxu0 0.0
  %79 = vmatpush1.msra.mxu0 %v31
  %80 = vmatprep.subr.mxu0 0.0
  %81 = vmatpush2.msra.mxu0 0.0
  %82 = vmatprep.subr.mxu0 0.0
  %83 = vmatpush2.msra.mxu0 0.0
  %84 = vmatprep.subr.mxu0 0.0
  %85 = vmatpush2.msra.mxu0 0.0
  %86 = vmatprep.subr.mxu0 0.0
  %87 = vmatpush2.msra.mxu0 0.0
  %88 = vmatprep.subr.mxu0 0.0
  %89 = vmatpush2.msra.mxu0 0.0
  %90 = vmatprep.subr.mxu0 0.0
  %91 = vmatpush2.msra.mxu0 0.0
  %92 = vmatprep.subr.mxu0 0.0
  %93 = vmatpush2.msra.mxu0 0.0
  %94 = vmatprep.subr.mxu0 0.0
  %95 = vmatpush2.msra.mxu0 0.0
  %96 = vmatprep.subr.mxu0 0.0
  %97 = vmatpush2.msra.mxu0 0.0
  %98 = vmatprep.subr.mxu0 0.0
  %99 = vmatpush2.msra.mxu0 0.0
  %100 = vmatprep.subr.mxu0 0.0
  %101 = vmatpush2.msra.mxu0 0.0
  %102 = vmatprep.subr.mxu0 0.0
  %103 = vmatpush2.msra.mxu0 0.0
  %104 = vmatprep.subr.mxu0 0.0
  %105 = vmatpush2.msra.mxu0 0.0
  %106 = vmatprep.subr.mxu0 0.0
  %107 = vmatpush2.msra.mxu0 0.0
  %108 = vmatprep.subr.mxu0 0.0
  %109 = vmatpush2.msra.mxu0 0.0
  %110 = vmatprep.subr.mxu0 0.0
  %111 = vmatpush2.msra.mxu0 0.0
  %112 = vmatprep.mubr.f32.mxu0 0.0
  %113 = vmatmul.mubr.f32.gmra.mxu0 %v37
  %v114 = vpop.f32.mrf.mxu0
  %v115 = vadd.f32 0.0, %v114
  %v116 = vpop.f32.mrf.mxu0
  %117 = vmatprep.mubr.f32.mxu0 0.0
  %118 = vmatmul.mubr.f32.gmra.mxu0 %v40
  %v119 = vpop.f32.mrf.mxu0
  %v120 = vadd.f32 0.0, %v119
  %v121 = vpop.f32.mrf.mxu0
  %122 = vmatprep.mubr.f32.mxu0 0.0
  %123 = vmatmul.mubr.f32.gmra.mxu0 %v43
  %v124 = vpop.f32.mrf.mxu0
  %v125 = vadd.f32 0.0, %v124
  %v126 = vpop.f32.mrf.mxu0
  %127 = vmatprep.mubr.f32.mxu0 0.0
  %128 = vmatmul.mubr.f32.gmra.mxu0 %v46
  %v129 = vpop.f32.mrf.mxu0
  %v130 = vadd.f32 0.0, %v129
  %v131 = vpop.f32.mrf.mxu0
  %132 = vdwg.mxu0
  %v133 = vadd.f32 %v23, %v115
  %v134 = vadd.f32 %v24, %v120
  %v135 = vadd.f32 %v25, %v125
  %v136 = vadd.f32 %v26, %v130
  %vm137 = vcmask 523264
  %138 = vst.msk [vmem:[#allocation2] sm:$0xff] %vm137, %v133
  %139 = vst.msk [vmem:[#allocation2 + $0x8] sm:$0xff] %vm137, %v134
  %140 = vst.msk [vmem:[#allocation2 + $0x10] sm:$0xff] %vm137, %v135
  %141 = vst.msk [vmem:[#allocation2 + $0x18] sm:$0xff] %vm137, %v136
  // Predicated region
  $region18: #{attention_forward.4} parent=0 // pred_check
    %p142 = pneg %p14
  $region19: #{attention_forward.4} parent=0 // pred_check_branch
    %144 = sbr.rel (%p142) target = $region21
  $region20: #{attention_forward.4} parent=0 // pred_region
    %v145 = vld [vmem:[#allocation2] sm:$0xff]
    %v146 = vld [vmem:[#allocation2 + $0x8] sm:$0xff]
    %v147 = vld [vmem:[#allocation2 + $0x10] sm:$0xff]
    %v148 = vld [vmem:[#allocation2 + $0x18] sm:$0xff]
    %v149 = vld [vmem:[%s2] sm:$0x1]
    %v151 = vlaneseq
    %v152 = vshrl.u32 %v151, 7
    %v153 = vsub.s32 0, %v152
    %v154 = vrot.slane %v149, %v153
    %v156 = vadd.f32 %v145, %v154
    %v157 = vadd.f32 %v146, %v154
    %v158 = vadd.f32 %v147, %v154
    %v159 = vadd.f32 %v148, %v154
    %160 = vst.msk [vmem:[%s3] sm:$0xff] %vm137, %v156
    %161 = vst.msk [vmem:[%s3 + $0x8] sm:$0xff] %vm137, %v157
    %162 = vst.msk [vmem:[%s3 + $0x10] sm:$0xff] %vm137, %v158
    %163 = vst.msk [vmem:[%s3 + $0x18] sm:$0xff] %vm137, %v159
  $region21: #{attention_forward.4} parent=0 // pred_fallthru
    _
  // Predicated region
  $region22: #{attention_forward.4} parent=0 // pred_check
    _
  $region23: #{attention_forward.4} parent=0 // pred_check_branch
    %165 = sbr.rel (0) target = $region25
  $region24: #{attention_forward.4} parent=0 // pred_region
    _
  $region25: #{attention_forward.4} parent=0 // pred_fallthru
    _
  // Predicated region
  $region26: #{attention_forward.4} parent=0 // pred_check
    _
  $region27: #{attention_forward.4} parent=0 // pred_check_branch
    %167 = sbr.rel (0) target = $region29
  $region28: #{attention_forward.4} parent=0 // pred_region
    _
  $region29: #{attention_forward.4} parent=0 // pred_fallthru
    _

// kernel: attention_forward.6
$region0: #{attention_forward.6}
  #allocation0 [shape = 'u32[]', space=smem, size = 0x4, offset = 0x4, fixed_abs, tag = 'smem constant byte address 0x4 - core index']
  #allocation1 [shape = 'u32[144,128]{1,0:T(1,128)}', space=vmem, size = 0x12000, scoped, tag = 'internal scratch']
  %s0 = inlined_call_operand.vmem [shape: f32[2,8,32], index: 0, kind: input, shape index: {}]
  %s1 = inlined_call_operand.vmem [shape: f32[2,16,64], index: 1, kind: input, shape index: {}]
  %s2 = inlined_call_operand.vmem [shape: f32[2,8,32], index: 2, kind: output, shape index: {}]
  %s3 = sld [smem:[#allocation0]]
  $region41: #{attention_forward.6} parent=0
    _
  %s5 = ssub.s32 1, %s3
  %s6 = scalar_select 0, %s5, %s3
  loop: start=0, step=1, limit=4
  $region2: #{attention_forward.6} parent=0 // loop_pre_header
    _
  $region3: #{attention_forward.6} parent=0 // loop_header
    %s8 = sphi 0, %s12
    %p9 = scmp.ge.s32.totalorder %s8, 4
    %s18 = sphi 0, %s20
    %s21 = sphi 0, %s18
    %s22 = sphi 0, %s21
    %s38 = sphi 0, %s22
    %s44 = sphi 0, %s46
    %s47 = sphi 0, %s44
    %s48 = sphi 0, %s47
    %s64 = sphi 0, %s48
    %s70 = sphi 0, %s72
    %s73 = sphi 0, %s70
    %s74 = sphi 0, %s73
    %s90 = sphi 0, %s74
  $region4: #{attention_forward.6} parent=0 // loop_header_branch
    %11 = sbr.rel (%p9) target = $region8
  $region5: #{attention_forward.6} parent=0 // loop_body
    %s13 = ssub.s32 %s8, 1
    %s14 = ssub.s32 %s8, 2
    %s15 = sadd.s32 %s8, 1
    %s16 = ssub.s32 %s8, %s15
    %p17 = scmp.eq.s32.totalorder %s16, 0
    %s19 = sadd.s32 %s18, 1
    %s20 = scalar_select %p17, %s18, %s19
    %p23 = pneg %p17
    %p24 = scmp.eq.s32.totalorder %s8, 1
    %p25 = por %p23, %p24
    %p26 = scmp.ne.s32.totalorder %s18, %s21
    %p27 = scmp.eq.s32.totalorder %s8, 0
    %p28 = por %p26, %p27
    %p29 = scmp.ne.s32.totalorder %s18, %s21
    %p30 = scmp.eq.s32.totalorder %s13, 1
    %p31 = por %p29, %p30
    %p32 = scmp.ne.s32.totalorder %s21, %s22
    %p33 = scmp.eq.s32.totalorder %s13, 0
    %p34 = por %p32, %p33
    %p35 = scmp.ne.s32.totalorder %s21, %s22
    %p36 = scmp.eq.s32.totalorder %s14, 1
    %p37 = por %p35, %p36
    %p39 = scmp.ne.s32.totalorder %s22, %s38
    %p40 = scmp.eq.s32.totalorder %s14, 0
    %p41 = por %p39, %p40
    %s42 = ssub.s32 %s8, %s15
    %p43 = scmp.eq.s32.totalorder %s42, 0
    %s45 = sadd.s32 %s44, 1
    %s46 = scalar_select %p43, %s44, %s45
    %p49 = pneg %p43
    %p50 = scmp.eq.s32.totalorder %s8, 1
    %p51 = por %p49, %p50
    %p52 = scmp.ne.s32.totalorder %s44, %s47
    %p53 = scmp.eq.s32.totalorder %s8, 0
    %p54 = por %p52, %p53
    %p55 = scmp.ne.s32.totalorder %s44, %s47
    %p56 = scmp.eq.s32.totalorder %s13, 1
    %p57 = por %p55, %p56
    %p58 = scmp.ne.s32.totalorder %s47, %s48
    %p59 = scmp.eq.s32.totalorder %s13, 0
    %p60 = por %p58, %p59
    %p61 = scmp.ne.s32.totalorder %s47, %s48
    %p62 = scmp.eq.s32.totalorder %s14, 1
    %p63 = por %p61, %p62
    %p65 = scmp.ne.s32.totalorder %s48, %s64
    %p66 = scmp.eq.s32.totalorder %s14, 0
    %p67 = por %p65, %p66
    %s68 = ssub.s32 %s8, %s15
    %p69 = scmp.eq.s32.totalorder %s68, 0
    %s71 = sadd.s32 %s70, 1
    %s72 = scalar_select %p69, %s70, %s71
    %p75 = pneg %p69
    %p76 = scmp.eq.s32.totalorder %s8, 1
    %p77 = por %p75, %p76
    %p78 = scmp.ne.s32.totalorder %s70, %s73
    %p79 = scmp.eq.s32.totalorder %s8, 0
    %p80 = por %p78, %p79
    %p81 = scmp.ne.s32.totalorder %s70, %s73
    %p82 = scmp.eq.s32.totalorder %s13, 1
    %p83 = por %p81, %p82
    %p84 = scmp.ne.s32.totalorder %s73, %s74
    %p85 = scmp.eq.s32.totalorder %s13, 0
    %p86 = por %p84, %p85
    %p87 = scmp.ne.s32.totalorder %s73, %s74
    %p88 = scmp.eq.s32.totalorder %s14, 1
    %p89 = por %p87, %p88
    %p91 = scmp.ne.s32.totalorder %s74, %s90
    %p92 = scmp.eq.s32.totalorder %s14, 0
    %p93 = por %p91, %p92
    %p94 = scmp.le.s32.totalorder 1, %s8
    %p95 = scmp.lt.s32.totalorder %s8, 3
    %p96 = pnand %p94, %p95
    %p97 = pneg %p96
    // Predicated region
    $region9: #{attention_forward.6} parent=5 // pred_check
      _
    $region10: #{attention_forward.6} parent=5 // pred_check_branch
      %99 = sbr.rel (%p96) target = $region12
    $region11: #{attention_forward.6} parent=5 // pred_region
      %s100 = ssub.s32 %s8, 1
    $region12: #{attention_forward.6} parent=5 // pred_fallthru
      _
    %p101 = scmp.lt.s32.totalorder %s8, 2
    // Predicated region
    $region13: #{attention_forward.6} parent=5 // pred_check
      %p102 = pneg %p101
    $region14: #{attention_forward.6} parent=5 // pred_check_branch
      %104 = sbr.rel (%p102) target = $region16
    $region15: #{attention_forward.6} parent=5 // pred_region
      // Predicated region
      $region17: #{attention_forward.6} parent=15 // pred_check
        %p105 = pneg %p28
      $region18: #{attention_forward.6} parent=15 // pred_check_branch
        %107 = sbr.rel (%p105) target = $region20
      $region19: #{attention_forward.6} parent=15 // pred_region
        %p108 = scmp.lt.s32.totalorder %s8, 1
        %s109 = scalar_select %p108, %s8, 1
        %s110 = smul.addr %s109, 8
        %s111 = scalar_lea.vmem %s0, %s110
      $region20: #{attention_forward.6} parent=15 // pred_fallthru
        _
      // Predicated region
      $region21: #{attention_forward.6} parent=15 // pred_check
        %p112 = pneg %p54
      $region22: #{attention_forward.6} parent=15 // pred_check_branch
        %114 = sbr.rel (%p112) target = $region24
      $region23: #{attention_forward.6} parent=15 // pred_region
        %p115 = scmp.lt.s32.totalorder %s8, 1
        %s116 = scalar_select %p115, %s8, 1
        %s117 = smul.addr %s116, 2
        %s118 = smul.addr %s117, 8
        %s119 = scalar_lea.vmem %s1, %s118
      $region24: #{attention_forward.6} parent=15 // pred_fallthru
        _
    $region16: #{attention_forward.6} parent=5 // pred_fallthru
      _
    %p120 = scmp.le.s32.totalorder 1, %s8
    %p121 = scmp.lt.s32.totalorder %s8, 3
    %p122 = pnand %p120, %p121
    %p123 = pneg %p122
    // Predicated region
    $region25: #{attention_forward.6} parent=5 // pred_check
      _
    $region26: #{attention_forward.6} parent=5 // pred_check_branch
      %125 = sbr.rel (%p122) target = $region28
    $region27: #{attention_forward.6} parent=5 // pred_region
      %s126 = ssub.s32 %s8, 1
      %p127 = scmp.lt.s32.totalorder %s13, 1
      %s128 = scalar_select %p127, %s13, 1
      %s129 = smul.addr %s128, 8
      %s130 = scalar_lea.vmem %s0, %s129
      %p131 = pneg %p34
      %p132 = pneg %p31
      %p133 = scmp.lt.s32.totalorder %s13, 1
      %s134 = scalar_select %p133, %s13, 1
      %s135 = smul.addr %s134, 2
      %s136 = smul.addr %s135, 8
      %s137 = scalar_lea.vmem %s1, %s136
      %p138 = pneg %p60
      %p139 = pneg %p57
      %p140 = pneg %p86
      %p141 = pneg %p83
      %p142 = scmp.lt.s32.totalorder %s13, 1
      %s143 = scalar_select %p142, %s13, 1
      %s144 = smul.addr %s143, 8
      %s145 = scalar_lea.vmem %s2, %s144
      %p146 = scmp.lt.s32.totalorder %s13, 1
      %s147 = scalar_select %p146, %s13, 1
      %s148 = smul.addr %s147, 8
      %s149 = scalar_lea.vmem %s0, %s148
      %p150 = scmp.lt.s32.totalorder %s13, 1
      %s151 = scalar_select %p150, %s13, 1
      %s152 = smul.addr %s151, 2
      %s153 = smul.addr %s152, 8
      %s154 = scalar_lea.vmem %s1, %s153
      %p155 = scmp.lt.s32.totalorder %s13, 1
      %s156 = scalar_select %p155, %s13, 1
      %s157 = smul.addr %s156, 8
      %s158 = scalar_lea.vmem %s2, %s157
      %v159 = vld [vmem:[%s149] sm:$0xff]
      %v160 = vld [vmem:[%s154] sm:$0xff]
      %v161 = vld [vmem:[%s154 + $0x8] sm:$0xff]
      %vm162 = vcmask 64512
      %v164 = vsel %vm162, %v159, 0
      %v167 = vsel %vm162, %v160, 0
      %v170 = vsel %vm162, %v161, 0
      %172 = vmatprep.subr.mxu0 0.0
      %173 = vmatpush1.xpose.msra.mxu0 0.0
      %174 = vmatprep.subr.mxu0 0.0
      %175 = vmatpush1.xpose.msra.mxu0 0.0
      %176 = vmatprep.subr.mxu0 0.0
      %177 = vmatpush1.xpose.msra.mxu0 0.0
      %178 = vmatprep.subr.mxu0 0.0
      %179 = vmatpush1.xpose.msra.mxu0 0.0
      %180 = vmatprep.subr.mxu0 0.0
      %181 = vmatpush1.xpose.msra.mxu0 0.0
      %182 = vmatprep.subr.mxu0 0.0
      %183 = vmatpush1.xpose.msra.mxu0 0.0
      %184 = vmatprep.subr.mxu0 0.0
      %185 = vmatpush1.xpose.msra.mxu0 0.0
      %186 = vmatprep.subr.mxu0 0.0
      %187 = vmatpush1.xpose.msra.mxu0 0.0
      %188 = vmatprep.subr.mxu0 0.0
      %189 = vmatpush1.xpose.msra.mxu0 0.0
      %190 = vmatprep.subr.mxu0 0.0
      %191 = vmatpush1.xpose.msra.mxu0 0.0
      %192 = vmatprep.subr.mxu0 0.0
      %193 = vmatpush1.xpose.msra.mxu0 0.0
      %194 = vmatprep.subr.mxu0 0.0
      %195 = vmatpush1.xpose.msra.mxu0 0.0
      %196 = vmatprep.subr.mxu0 0.0
      %197 = vmatpush1.xpose.msra.mxu0 0.0
      %198 = vmatprep.subr.mxu0 0.0
      %199 = vmatpush1.xpose.msra.mxu0 0.0
      %200 = vmatprep.subr.mxu0 0.0
      %201 = vmatpush1.xpose.msra.mxu0 %v170
      %202 = vmatprep.subr.mxu0 0.0
      %203 = vmatpush1.xpose.msra.mxu0 %v167
      %204 = vmatprep.subr.mxu0 0.0
      %205 = vmatpush2.xpose.msra.mxu0 0.0
      %206 = vmatprep.subr.mxu0 0.0
      %207 = vmatpush2.xpose.msra.mxu0 0.0
      %208 = vmatprep.subr.mxu0 0.0
      %209 = vmatpush2.xpose.msra.mxu0 0.0
      %210 = vmatprep.subr.mxu0 0.0
      %211 = vmatpush2.xpose.msra.mxu0 0.0
      %212 = vmatprep.subr.mxu0 0.0
      %213 = vmatpush2.xpose.msra.mxu0 0.0
      %214 = vmatprep.subr.mxu0 0.0
      %215 = vmatpush2.xpose.msra.mxu0 0.0
      %216 = vmatprep.subr.mxu0 0.0
      %217 = vmatpush2.xpose.msra.mxu0 0.0
      %218 = vmatprep.subr.mxu0 0.0
      %219 = vmatpush2.xpose.msra.mxu0 0.0
      %220 = vmatprep.subr.mxu0 0.0
      %221 = vmatpush2.xpose.msra.mxu0 0.0
      %222 = vmatprep.subr.mxu0 0.0
      %223 = vmatpush2.xpose.msra.mxu0 0.0
      %224 = vmatprep.subr.mxu0 0.0
      %225 = vmatpush2.xpose.msra.mxu0 0.0
      %226 = vmatprep.subr.mxu0 0.0
      %227 = vmatpush2.xpose.msra.mxu0 0.0
      %228 = vmatprep.subr.mxu0 0.0
      %229 = vmatpush2.xpose.msra.mxu0 0.0
      %230 = vmatprep.subr.mxu0 0.0
      %231 = vmatpush2.xpose.msra.mxu0 0.0
      %232 = vmatprep.subr.mxu0 0.0
      %233 = vmatpush2.xpose.msra.mxu0 0.0
      %234 = vmatprep.subr.mxu0 0.0
      %235 = vmatpush2.xpose.msra.mxu0 0.0
      %236 = vmatprep.mubr.f32.mxu0 0.0
      %237 = vmatmul.mubr.f32.gmra.mxu0 %v164
      %v238 = vpop.f32.mrf.mxu0
      %v239 = vadd.f32 0.0, %v238
      %v240 = vpop.f32.mrf.mxu0
      %241 = vdwg.mxu0
      %v242 = vmul.f32 %v239, 0.35355338
      %vm243 = vcmask 130048
      %v244 = vsel %vm243, %v242, -inf
      %245 = vmax.xlane.f32.xlu0 %v244
      %v246 = vpop.xlane.xlu0 %245
      %v247 = vsub.f32 %v242, %v246
      %v248 = vmul.f32 %v247, 1.442695
      %v249 = vpow.pop %v248
      %v250 = vsel %vm243, %v249, 0.0
      %251 = vadd.xlane.f32.xlu0 %v250
      %v252 = vpop.xlane.xlu0 %251
      %v253 = vrcp.pop %v252
      %v254 = vmul.f32 %v249, %v253
      %255 = vrot.lane.b32.xlu0 %v160, 96
      %v256 = vpop.permute.xlu0 %255
      %257 = vrot.lane.b32.xlu0 %v161, 96
      %v258 = vpop.permute.xlu0 %257
      %v262 = vsel %vm243, %v254, 0
      %264 = vmatprep.subr.mxu0 0.0
      %265 = vmatpush1.msra.mxu0 0.0
      %266 = vmatprep.subr.mxu0 0.0
      %267 = vmatpush1.msra.mxu0 0.0
      %268 = vmatprep.subr.mxu0 0.0
      %269 = vmatpush1.msra.mxu0 0.0
      %270 = vmatprep.subr.mxu0 0.0
      %271 = vmatpush1.msra.mxu0 0.0
      %272 = vmatprep.subr.mxu0 0.0
      %273 = vmatpush1.msra.mxu0 0.0
      %274 = vmatprep.subr.mxu0 0.0
      %275 = vmatpush1.msra.mxu0 0.0
      %276 = vmatprep.subr.mxu0 0.0
      %277 = vmatpush1.msra.mxu0 0.0
      %278 = vmatprep.subr.mxu0 0.0
      %279 = vmatpush1.msra.mxu0 0.0
      %280 = vmatprep.subr.mxu0 0.0
      %281 = vmatpush1.msra.mxu0 0.0
      %282 = vmatprep.subr.mxu0 0.0
      %283 = vmatpush1.msra.mxu0 0.0
      %284 = vmatprep.subr.mxu0 0.0
      %285 = vmatpush1.msra.mxu0 0.0
      %286 = vmatprep.subr.mxu0 0.0
      %287 = vmatpush1.msra.mxu0 0.0
      %288 = vmatprep.subr.mxu0 0.0
      %289 = vmatpush1.msra.mxu0 0.0
      %290 = vmatprep.subr.mxu0 0.0
      %291 = vmatpush1.msra.mxu0 0.0
      %292 = vmatprep.subr.mxu0 0.0
      %293 = vmatpush1.msra.mxu0 %v258
      %294 = vmatprep.subr.mxu0 0.0
      %295 = vmatpush1.msra.mxu0 %v256
      %296 = vmatprep.subr.mxu0 0.0
      %297 = vmatpush2.msra.mxu0 0.0
      %298 = vmatprep.subr.mxu0 0.0
      %299 = vmatpush2.msra.mxu0 0.0
      %300 = vmatprep.subr.mxu0 0.0
      %301 = vmatpush2.msra.mxu0 0.0
      %302 = vmatprep.subr.mxu0 0.0
      %303 = vmatpush2.msra.mxu0 0.0
      %304 = vmatprep.subr.mxu0 0.0
      %305 = vmatpush2.msra.mxu0 0.0
      %306 = vmatprep.subr.mxu0 0.0
      %307 = vmatpush2.msra.mxu0 0.0
      %308 = vmatprep.subr.mxu0 0.0
      %309 = vmatpush2.msra.mxu0 0.0
      %310 = vmatprep.subr.mxu0 0.0
      %311 = vmatpush2.msra.mxu0 0.0
      %312 = vmatprep.subr.mxu0 0.0
      %313 = vmatpush2.msra.mxu0 0.0
      %314 = vmatprep.subr.mxu0 0.0
      %315 = vmatpush2.msra.mxu0 0.0
      %316 = vmatprep.subr.mxu0 0.0
      %317 = vmatpush2.msra.mxu0 0.0
      %318 = vmatprep.subr.mxu0 0.0
      %319 = vmatpush2.msra.mxu0 0.0
      %320 = vmatprep.subr.mxu0 0.0
      %321 = vmatpush2.msra.mxu0 0.0
      %322 = vmatprep.subr.mxu0 0.0
      %323 = vmatpush2.msra.mxu0 0.0
      %324 = vmatprep.subr.mxu0 0.0
      %325 = vmatpush2.msra.mxu0 0.0
      %326 = vmatprep.subr.mxu0 0.0
      %327 = vmatpush2.msra.mxu0 0.0
      %328 = vmatprep.mubr.f32.mxu0 0.0
      %329 = vmatmul.mubr.f32.gmra.mxu0 %v262
      %v330 = vpop.f32.mrf.mxu0
      %v331 = vadd.f32 0.0, %v330
      %v332 = vpop.f32.mrf.mxu0
      %333 = vdwg.mxu0
      %334 = vst.msk [vmem:[%s158] sm:$0xff] %vm162, %v331
      %v335 = vld [vmem:[%s149] sm:$0xff]
      %v336 = vld [vmem:[%s154] sm:$0xff]
      %v337 = vld [vmem:[%s154 + $0x8] sm:$0xff]
      %339 = vrot.lane.b32.xlu0 %v335, 120
      %v340 = vpop.permute.xlu0 %339
      %343 = vrot.lane.b32.xlu0 %v336, 120
      %v344 = vpop.permute.xlu0 %343
      %345 = vrot.lane.b32.xlu0 %v337, 120
      %v346 = vpop.permute.xlu0 %345
      %v347 = vsel %vm162, %v340, 0
      %v349 = vsel %vm162, %v344, 0
      %v351 = vsel %vm162, %v346, 0
      %353 = vmatprep.subr.mxu0 0.0
      %354 = vmatpush1.xpose.msra.mxu0 0.0
      %355 = vmatprep.subr.mxu0 0.0
      %356 = vmatpush1.xpose.msra.mxu0 0.0
      %357 = vmatprep.subr.mxu0 0.0
      %358 = vmatpush1.xpose.msra.mxu0 0.0
      %359 = vmatprep.subr.mxu0 0.0
      %360 = vmatpush1.xpose.msra.mxu0 0.0
      %361 = vmatprep.subr.mxu0 0.0
      %362 = vmatpush1.xpose.msra.mxu0 0.0
      %363 = vmatprep.subr.mxu0 0.0
      %364 = vmatpush1.xpose.msra.mxu0 0.0
      %365 = vmatprep.subr.mxu0 0.0
      %366 = vmatpush1.xpose.msra.mxu0 0.0
      %367 = vmatprep.subr.mxu0 0.0
      %368 = vmatpush1.xpose.msra.mxu0 0.0
      %369 = vmatprep.subr.mxu0 0.0
      %370 = vmatpush1.xpose.msra.mxu0 0.0
      %371 = vmatprep.subr.mxu0 0.0
      %372 = vmatpush1.xpose.msra.mxu0 0.0
      %373 = vmatprep.subr.mxu0 0.0
      %374 = vmatpush1.xpose.msra.mxu0 0.0
      %375 = vmatprep.subr.mxu0 0.0
      %376 = vmatpush1.xpose.msra.mxu0 0.0
      %377 = vmatprep.subr.mxu0 0.0
      %378 = vmatpush1.xpose.msra.mxu0 0.0
      %379 = vmatprep.subr.mxu0 0.0
      %380 = vmatpush1.xpose.msra.mxu0 0.0
      %381 = vmatprep.subr.mxu0 0.0
      %382 = vmatpush1.xpose.msra.mxu0 %v351
      %383 = vmatprep.subr.mxu0 0.0
      %384 = vmatpush1.xpose.msra.mxu0 %v349
      %385 = vmatprep.subr.mxu0 0.0
      %386 = vmatpush2.xpose.msra.mxu0 0.0
      %387 = vmatprep.subr.mxu0 0.0
      %388 = vmatpush2.xpose.msra.mxu0 0.0
      %389 = vmatprep.subr.mxu0 0.0
      %390 = vmatpush2.xpose.msra.mxu0 0.0
      %391 = vmatprep.subr.mxu0 0.0
      %392 = vmatpush2.xpose.msra.mxu0 0.0
      %393 = vmatprep.subr.mxu0 0.0
      %394 = vmatpush2.xpose.msra.mxu0 0.0
      %395 = vmatprep.subr.mxu0 0.0
      %396 = vmatpush2.xpose.msra.mxu0 0.0
      %397 = vmatprep.subr.mxu0 0.0
      %398 = vmatpush2.xpose.msra.mxu0 0.0
      %399 = vmatprep.subr.mxu0 0.0
      %400 = vmatpush2.xpose.msra.mxu0 0.0
      %401 = vmatprep.subr.mxu0 0.0
      %402 = vmatpush2.xpose.msra.mxu0 0.0
      %403 = vmatprep.subr.mxu0 0.0
      %404 = vmatpush2.xpose.msra.mxu0 0.0
      %405 = vmatprep.subr.mxu0 0.0
      %406 = vmatpush2.xpose.msra.mxu0 0.0
      %407 = vmatprep.subr.mxu0 0.0
      %408 = vmatpush2.xpose.msra.mxu0 0.0
      %409 = vmatprep.subr.mxu0 0.0
      %410 = vmatpush2.xpose.msra.mxu0 0.0
      %411 = vmatprep.subr.mxu0 0.0
      %412 = vmatpush2.xpose.msra.mxu0 0.0
      %413 = vmatprep.subr.mxu0 0.0
      %414 = vmatpush2.xpose.msra.mxu0 0.0
      %415 = vmatprep.subr.mxu0 0.0
      %416 = vmatpush2.xpose.msra.mxu0 0.0
      %417 = vmatprep.mubr.f32.mxu0 0.0
      %418 = vmatmul.mubr.f32.gmra.mxu0 %v347
      %v419 = vpop.f32.mrf.mxu0
      %v420 = vadd.f32 0.0, %v419
      %v421 = vpop.f32.mrf.mxu0
      %422 = vdwg.mxu0
      %v423 = vmul.f32 %v420, 0.35355338
      %v424 = vsel %vm243, %v423, -inf
      %425 = vmax.xlane.f32.xlu0 %v424
      %v426 = vpop.xlane.xlu0 %425
      %v427 = vsub.f32 %v423, %v426
      %v428 = vmul.f32 %v427, 1.442695
      %v429 = vpow.pop %v428
      %v430 = vsel %vm243, %v429, 0.0
      %431 = vadd.xlane.f32.xlu0 %v430
      %v432 = vpop.xlane.xlu0 %431
      %v433 = vrcp.pop %v432
      %v434 = vmul.f32 %v429, %v433
      %435 = vrot.lane.b32.xlu0 %v336, 88
      %v436 = vpop.permute.xlu0 %435
      %437 = vrot.lane.b32.xlu0 %v337, 88
      %v438 = vpop.permute.xlu0 %437
      %v442 = vsel %vm243, %v434, 0
      %444 = vmatprep.subr.mxu0 0.0
      %445 = vmatpush1.msra.mxu0 0.0
      %446 = vmatprep.subr.mxu0 0.0
      %447 = vmatpush1.msra.mxu0 0.0
      %448 = vmatprep.subr.mxu0 0.0
      %449 = vmatpush1.msra.mxu0 0.0
      %450 = vmatprep.subr.mxu0 0.0
      %451 = vmatpush1.msra.mxu0 0.0
      %452 = vmatprep.subr.mxu0 0.0
      %453 = vmatpush1.msra.mxu0 0.0
      %454 = vmatprep.subr.mxu0 0.0
      %455 = vmatpush1.msra.mxu0 0.0
      %456 = vmatprep.subr.mxu0 0.0
      %457 = vmatpush1.msra.mxu0 0.0
      %458 = vmatprep.subr.mxu0 0.0
      %459 = vmatpush1.msra.mxu0 0.0
      %460 = vmatprep.subr.mxu0 0.0
      %461 = vmatpush1.msra.mxu0 0.0
      %462 = vmatprep.subr.mxu0 0.0
      %463 = vmatpush1.msra.mxu0 0.0
      %464 = vmatprep.subr.mxu0 0.0
      %465 = vmatpush1.msra.mxu0 0.0
      %466 = vmatprep.subr.mxu0 0.0
      %467 = vmatpush1.msra.mxu0 0.0
      %468 = vmatprep.subr.mxu0 0.0
      %469 = vmatpush1.msra.mxu0 0.0
      %470 = vmatprep.subr.mxu0 0.0
      %471 = vmatpush1.msra.mxu0 0.0
      %472 = vmatprep.subr.mxu0 0.0
      %473 = vmatpush1.msra.mxu0 %v438
      %474 = vmatprep.subr.mxu0 0.0
      %475 = vmatpush1.msra.mxu0 %v436
      %476 = vmatprep.subr.mxu0 0.0
      %477 = vmatpush2.msra.mxu0 0.0
      %478 = vmatprep.subr.mxu0 0.0
      %479 = vmatpush2.msra.mxu0 0.0
      %480 = vmatprep.subr.mxu0 0.0
      %481 = vmatpush2.msra.mxu0 0.0
      %482 = vmatprep.subr.mxu0 0.0
      %483 = vmatpush2.msra.mxu0 0.0
      %484 = vmatprep.subr.mxu0 0.0
      %485 = vmatpush2.msra.mxu0 0.0
      %486 = vmatprep.subr.mxu0 0.0
      %487 = vmatpush2.msra.mxu0 0.0
      %488 = vmatprep.subr.mxu0 0.0
      %489 = vmatpush2.msra.mxu0 0.0
      %490 = vmatprep.subr.mxu0 0.0
      %491 = vmatpush2.msra.mxu0 0.0
      %492 = vmatprep.subr.mxu0 0.0
      %493 = vmatpush2.msra.mxu0 0.0
      %494 = vmatprep.subr.mxu0 0.0
      %495 = vmatpush2.msra.mxu0 0.0
      %496 = vmatprep.subr.mxu0 0.0
      %497 = vmatpush2.msra.mxu0 0.0
      %498 = vmatprep.subr.mxu0 0.0
      %499 = vmatpush2.msra.mxu0 0.0
      %500 = vmatprep.subr.mxu0 0.0
      %501 = vmatpush2.msra.mxu0 0.0
      %502 = vmatprep.subr.mxu0 0.0
      %503 = vmatpush2.msra.mxu0 0.0
      %504 = vmatprep.subr.mxu0 0.0
      %505 = vmatpush2.msra.mxu0 0.0
      %506 = vmatprep.subr.mxu0 0.0
      %507 = vmatpush2.msra.mxu0 0.0
      %508 = vmatprep.mubr.f32.mxu0 0.0
      %509 = vmatmul.mubr.f32.gmra.mxu0 %v442
      %v510 = vpop.f32.mrf.mxu0
      %v511 = vadd.f32 0.0, %v510
      %v512 = vpop.f32.mrf.mxu0
      %513 = vdwg.mxu0
      %515 = vrot.lane.b32.xlu0 %v511, 8
      %v516 = vpop.permute.xlu0 %515
      %vm518 = vcmask 130112
      %519 = vst.msk [vmem:[%s158] sm:$0xff] %vm518, %v516
      %v520 = vld [vmem:[%s149] sm:$0xff]
      %v521 = vld [vmem:[%s154] sm:$0xff]
      %v522 = vld [vmem:[%s154 + $0x8] sm:$0xff]
      %524 = vrot.lane.b32.xlu0 %v520, 112
      %v525 = vpop.permute.xlu0 %524
      %528 = vrot.lane.b32.xlu0 %v521, 112
      %v529 = vpop.permute.xlu0 %528
      %530 = vrot.lane.b32.xlu0 %v522, 112
      %v531 = vpop.permute.xlu0 %530
      %v532 = vsel %vm162, %v525, 0
      %v534 = vsel %vm162, %v529, 0
      %v536 = vsel %vm162, %v531, 0
      %538 = vmatprep.subr.mxu0 0.0
      %539 = vmatpush1.xpose.msra.mxu0 0.0
      %540 = vmatprep.subr.mxu0 0.0
      %541 = vmatpush1.xpose.msra.mxu0 0.0
      %542 = vmatprep.subr.mxu0 0.0
      %543 = vmatpush1.xpose.msra.mxu0 0.0
      %544 = vmatprep.subr.mxu0 0.0
      %545 = vmatpush1.xpose.msra.mxu0 0.0
      %546 = vmatprep.subr.mxu0 0.0
      %547 = vmatpush1.xpose.msra.mxu0 0.0
      %548 = vmatprep.subr.mxu0 0.0
      %549 = vmatpush1.xpose.msra.mxu0 0.0
      %550 = vmatprep.subr.mxu0 0.0
      %551 = vmatpush1.xpose.msra.mxu0 0.0
      %552 = vmatprep.subr.mxu0 0.0
      %553 = vmatpush1.xpose.msra.mxu0 0.0
      %554 = vmatprep.subr.mxu0 0.0
      %555 = vmatpush1.xpose.msra.mxu0 0.0
      %556 = vmatprep.subr.mxu0 0.0
      %557 = vmatpush1.xpose.msra.mxu0 0.0
      %558 = vmatprep.subr.mxu0 0.0
      %559 = vmatpush1.xpose.msra.mxu0 0.0
      %560 = vmatprep.subr.mxu0 0.0
      %561 = vmatpush1.xpose.msra.mxu0 0.0
      %562 = vmatprep.subr.mxu0 0.0
      %563 = vmatpush1.xpose.msra.mxu0 0.0
      %564 = vmatprep.subr.mxu0 0.0
      %565 = vmatpush1.xpose.msra.mxu0 0.0
      %566 = vmatprep.subr.mxu0 0.0
      %567 = vmatpush1.xpose.msra.mxu0 %v536
      %568 = vmatprep.subr.mxu0 0.0
      %569 = vmatpush1.xpose.msra.mxu0 %v534
      %570 = vmatprep.subr.mxu0 0.0
      %571 = vmatpush2.xpose.msra.mxu0 0.0
      %572 = vmatprep.subr.mxu0 0.0
      %573 = vmatpush2.xpose.msra.mxu0 0.0
      %574 = vmatprep.subr.mxu0 0.0
      %575 = vmatpush2.xpose.msra.mxu0 0.0
      %576 = vmatprep.subr.mxu0 0.0
      %577 = vmatpush2.xpose.msra.mxu0 0.0
      %578 = vmatprep.subr.mxu0 0.0
      %579 = vmatpush2.xpose.msra.mxu0 0.0
      %580 = vmatprep.subr.mxu0 0.0
      %581 = vmatpush2.xpose.msra.mxu0 0.0
      %582 = vmatprep.subr.mxu0 0.0
      %583 = vmatpush2.xpose.msra.mxu0 0.0
      %584 = vmatprep.subr.mxu0 0.0
      %585 = vmatpush2.xpose.msra.mxu0 0.0
      %586 = vmatprep.subr.mxu0 0.0
      %587 = vmatpush2.xpose.msra.mxu0 0.0
      %588 = vmatprep.subr.mxu0 0.0
      %589 = vmatpush2.xpose.msra.mxu0 0.0
      %590 = vmatprep.subr.mxu0 0.0
      %591 = vmatpush2.xpose.msra.mxu0 0.0
      %592 = vmatprep.subr.mxu0 0.0
      %593 = vmatpush2.xpose.msra.mxu0 0.0
      %594 = vmatprep.subr.mxu0 0.0
      %595 = vmatpush2.xpose.msra.mxu0 0.0
      %596 = vmatprep.subr.mxu0 0.0
      %597 = vmatpush2.xpose.msra.mxu0 0.0
      %598 = vmatprep.subr.mxu0 0.0
      %599 = vmatpush2.xpose.msra.mxu0 0.0
      %600 = vmatprep.subr.mxu0 0.0
      %601 = vmatpush2.xpose.msra.mxu0 0.0
      %602 = vmatprep.mubr.f32.mxu0 0.0
      %603 = vmatmul.mubr.f32.gmra.mxu0 %v532
      %v604 = vpop.f32.mrf.mxu0
      %v605 = vadd.f32 0.0, %v604
      %v606 = vpop.f32.mrf.mxu0
      %607 = vdwg.mxu0
      %v608 = vmul.f32 %v605, 0.35355338
      %v609 = vsel %vm243, %v608, -inf
      %610 = vmax.xlane.f32.xlu0 %v609
      %v611 = vpop.xlane.xlu0 %610
      %v612 = vsub.f32 %v608, %v611
      %v613 = vmul.f32 %v612, 1.442695
      %v614 = vpow.pop %v613
      %v615 = vsel %vm243, %v614, 0.0
      %616 = vadd.xlane.f32.xlu0 %v615
      %v617 = vpop.xlane.xlu0 %616
      %v618 = vrcp.pop %v617
      %v619 = vmul.f32 %v614, %v618
      %620 = vrot.lane.b32.xlu0 %v521, 80
      %v621 = vpop.permute.xlu0 %620
      %622 = vrot.lane.b32.xlu0 %v522, 80
      %v623 = vpop.permute.xlu0 %622
      %v627 = vsel %vm243, %v619, 0
      %629 = vmatprep.subr.mxu0 0.0
      %630 = vmatpush1.msra.mxu0 0.0
      %631 = vmatprep.subr.mxu0 0.0
      %632 = vmatpush1.msra.mxu0 0.0
      %633 = vmatprep.subr.mxu0 0.0
      %634 = vmatpush1.msra.mxu0 0.0
      %635 = vmatprep.subr.mxu0 0.0
      %636 = vmatpush1.msra.mxu0 0.0
      %637 = vmatprep.subr.mxu0 0.0
      %638 = vmatpush1.msra.mxu0 0.0
      %639 = vmatprep.subr.mxu0 0.0
      %640 = vmatpush1.msra.mxu0 0.0
      %641 = vmatprep.subr.mxu0 0.0
      %642 = vmatpush1.msra.mxu0 0.0
      %643 = vmatprep.subr.mxu0 0.0
      %644 = vmatpush1.msra.mxu0 0.0
      %645 = vmatprep.subr.mxu0 0.0
      %646 = vmatpush1.msra.mxu0 0.0
      %647 = vmatprep.subr.mxu0 0.0
      %648 = vmatpush1.msra.mxu0 0.0
      %649 = vmatprep.subr.mxu0 0.0
      %650 = vmatpush1.msra.mxu0 0.0
      %651 = vmatprep.subr.mxu0 0.0
      %652 = vmatpush1.msra.mxu0 0.0
      %653 = vmatprep.subr.mxu0 0.0
      %654 = vmatpush1.msra.mxu0 0.0
      %655 = vmatprep.subr.mxu0 0.0
      %656 = vmatpush1.msra.mxu0 0.0
      %657 = vmatprep.subr.mxu0 0.0
      %658 = vmatpush1.msra.mxu0 %v623
      %659 = vmatprep.subr.mxu0 0.0
      %660 = vmatpush1.msra.mxu0 %v621
      %661 = vmatprep.subr.mxu0 0.0
      %662 = vmatpush2.msra.mxu0 0.0
      %663 = vmatprep.subr.mxu0 0.0
      %664 = vmatpush2.msra.mxu0 0.0
      %665 = vmatprep.subr.mxu0 0.0
      %666 = vmatpush2.msra.mxu0 0.0
      %667 = vmatprep.subr.mxu0 0.0
      %668 = vmatpush2.msra.mxu0 0.0
      %669 = vmatprep.subr.mxu0 0.0
      %670 = vmatpush2.msra.mxu0 0.0
      %671 = vmatprep.subr.mxu0 0.0
      %672 = vmatpush2.msra.mxu0 0.0
      %673 = vmatprep.subr.mxu0 0.0
      %674 = vmatpush2.msra.mxu0 0.0
      %675 = vmatprep.subr.mxu0 0.0
      %676 = vmatpush2.msra.mxu0 0.0
      %677 = vmatprep.subr.mxu0 0.0
      %678 = vmatpush2.msra.mxu0 0.0
      %679 = vmatprep.subr.mxu0 0.0
      %680 = vmatpush2.msra.mxu0 0.0
      %681 = vmatprep.subr.mxu0 0.0
      %682 = vmatpush2.msra.mxu0 0.0
      %683 = vmatprep.subr.mxu0 0.0
      %684 = vmatpush2.msra.mxu0 0.0
      %685 = vmatprep.subr.mxu0 0.0
      %686 = vmatpush2.msra.mxu0 0.0
      %687 = vmatprep.subr.mxu0 0.0
      %688 = vmatpush2.msra.mxu0 0.0
      %689 = vmatprep.subr.mxu0 0.0
      %690 = vmatpush2.msra.mxu0 0.0
      %691 = vmatprep.subr.mxu0 0.0
      %692 = vmatpush2.msra.mxu0 0.0
      %693 = vmatprep.mubr.f32.mxu0 0.0
      %694 = vmatmul.mubr.f32.gmra.mxu0 %v627
      %v695 = vpop.f32.mrf.mxu0
      %v696 = vadd.f32 0.0, %v695
      %v697 = vpop.f32.mrf.mxu0
      %698 = vdwg.mxu0
      %700 = vrot.lane.b32.xlu0 %v696, 16
      %v701 = vpop.permute.xlu0 %700
      %vm703 = vcmask 195712
      %704 = vst.msk [vmem:[%s158] sm:$0xff] %vm703, %v701
      %v705 = vld [vmem:[%s149] sm:$0xff]
      %v706 = vld [vmem:[%s154] sm:$0xff]
      %v707 = vld [vmem:[%s154 + $0x8] sm:$0xff]
      %709 = vrot.lane.b32.xlu0 %v705, 104
      %v710 = vpop.permute.xlu0 %709
      %713 = vrot.lane.b32.xlu0 %v706, 104
      %v714 = vpop.permute.xlu0 %713
      %715 = vrot.lane.b32.xlu0 %v707, 104
      %v716 = vpop.permute.xlu0 %715
      %v717 = vsel %vm162, %v710, 0
      %v719 = vsel %vm162, %v714, 0
      %v721 = vsel %vm162, %v716, 0
      %723 = vmatprep.subr.mxu0 0.0
      %724 = vmatpush1.xpose.msra.mxu0 0.0
      %725 = vmatprep.subr.mxu0 0.0
      %726 = vmatpush1.xpose.msra.mxu0 0.0
      %727 = vmatprep.subr.mxu0 0.0
      %728 = vmatpush1.xpose.msra.mxu0 0.0
      %729 = vmatprep.subr.mxu0 0.0
      %730 = vmatpush1.xpose.msra.mxu0 0.0
      %731 = vmatprep.subr.mxu0 0.0
      %732 = vmatpush1.xpose.msra.mxu0 0.0
      %733 = vmatprep.subr.mxu0 0.0
      %734 = vmatpush1.xpose.msra.mxu0 0.0
      %735 = vmatprep.subr.mxu0 0.0
      %736 = vmatpush1.xpose.msra.mxu0 0.0
      %737 = vmatprep.subr.mxu0 0.0
      %738 = vmatpush1.xpose.msra.mxu0 0.0
      %739 = vmatprep.subr.mxu0 0.0
      %740 = vmatpush1.xpose.msra.mxu0 0.0
      %741 = vmatprep.subr.mxu0 0.0
      %742 = vmatpush1.xpose.msra.mxu0 0.0
      %743 = vmatprep.subr.mxu0 0.0
      %744 = vmatpush1.xpose.msra.mxu0 0.0
      %745 = vmatprep.subr.mxu0 0.0
      %746 = vmatpush1.xpose.msra.mxu0 0.0
      %747 = vmatprep.subr.mxu0 0.0
      %748 = vmatpush1.xpose.msra.mxu0 0.0
      %749 = vmatprep.subr.mxu0 0.0
      %750 = vmatpush1.xpose.msra.mxu0 0.0
      %751 = vmatprep.subr.mxu0 0.0
      %752 = vmatpush1.xpose.msra.mxu0 %v721
      %753 = vmatprep.subr.mxu0 0.0
      %754 = vmatpush1.xpose.msra.mxu0 %v719
      %755 = vmatprep.subr.mxu0 0.0
      %756 = vmatpush2.xpose.msra.mxu0 0.0
      %757 = vmatprep.subr.mxu0 0.0
      %758 = vmatpush2.xpose.msra.mxu0 0.0
      %759 = vmatprep.subr.mxu0 0.0
      %760 = vmatpush2.xpose.msra.mxu0 0.0
      %761 = vmatprep.subr.mxu0 0.0
      %762 = vmatpush2.xpose.msra.mxu0 0.0
      %763 = vmatprep.subr.mxu0 0.0
      %764 = vmatpush2.xpose.msra.mxu0 0.0
      %765 = vmatprep.subr.mxu0 0.0
      %766 = vmatpush2.xpose.msra.mxu0 0.0
      %767 = vmatprep.subr.mxu0 0.0
      %768 = vmatpush2.xpose.msra.mxu0 0.0
      %769 = vmatprep.subr.mxu0 0.0
      %770 = vmatpush2.xpose.msra.mxu0 0.0
      %771 = vmatprep.subr.mxu0 0.0
      %772 = vmatpush2.xpose.msra.mxu0 0.0
      %773 = vmatprep.subr.mxu0 0.0
      %774 = vmatpush2.xpose.msra.mxu0 0.0
      %775 = vmatprep.subr.mxu0 0.0
      %776 = vmatpush2.xpose.msra.mxu0 0.0
      %777 = vmatprep.subr.mxu0 0.0
      %778 = vmatpush2.xpose.msra.mxu0 0.0
      %779 = vmatprep.subr.mxu0 0.0
      %780 = vmatpush2.xpose.msra.mxu0 0.0
      %781 = vmatprep.subr.mxu0 0.0
      %782 = vmatpush2.xpose.msra.mxu0 0.0
      %783 = vmatprep.subr.mxu0 0.0
      %784 = vmatpush2.xpose.msra.mxu0 0.0
      %785 = vmatprep.subr.mxu0 0.0
      %786 = vmatpush2.xpose.msra.mxu0 0.0
      %787 = vmatprep.mubr.f32.mxu0 0.0
      %788 = vmatmul.mubr.f32.gmra.mxu0 %v717
      %v789 = vpop.f32.mrf.mxu0
      %v790 = vadd.f32 0.0, %v789
      %v791 = vpop.f32.mrf.mxu0
      %792 = vdwg.mxu0
      %v793 = vmul.f32 %v790, 0.35355338
      %v794 = vsel %vm243, %v793, -inf
      %795 = vmax.xlane.f32.xlu0 %v794
      %v796 = vpop.xlane.xlu0 %795
      %v797 = vsub.f32 %v793, %v796
      %v798 = vmul.f32 %v797, 1.442695
      %v799 = vpow.pop %v798
      %v800 = vsel %vm243, %v799, 0.0
      %801 = vadd.xlane.f32.xlu0 %v800
      %v802 = vpop.xlane.xlu0 %801
      %v803 = vrcp.pop %v802
      %v804 = vmul.f32 %v799, %v803
      %805 = vrot.lane.b32.xlu0 %v706, 72
      %v806 = vpop.permute.xlu0 %805
      %807 = vrot.lane.b32.xlu0 %v707, 72
      %v808 = vpop.permute.xlu0 %807
      %v812 = vsel %vm243, %v804, 0
      %814 = vmatprep.subr.mxu0 0.0
      %815 = vmatpush1.msra.mxu0 0.0
      %816 = vmatprep.subr.mxu0 0.0
      %817 = vmatpush1.msra.mxu0 0.0
      %818 = vmatprep.subr.mxu0 0.0
      %819 = vmatpush1.msra.mxu0 0.0
      %820 = vmatprep.subr.mxu0 0.0
      %821 = vmatpush1.msra.mxu0 0.0
      %822 = vmatprep.subr.mxu0 0.0
      %823 = vmatpush1.msra.mxu0 0.0
      %824 = vmatprep.subr.mxu0 0.0
      %825 = vmatpush1.msra.mxu0 0.0
      %826 = vmatprep.subr.mxu0 0.0
      %827 = vmatpush1.msra.mxu0 0.0
      %828 = vmatprep.subr.mxu0 0.0
      %829 = vmatpush1.msra.mxu0 0.0
      %830 = vmatprep.subr.mxu0 0.0
      %831 = vmatpush1.msra.mxu0 0.0
      %832 = vmatprep.subr.mxu0 0.0
      %833 = vmatpush1.msra.mxu0 0.0
      %834 = vmatprep.subr.mxu0 0.0
      %835 = vmatpush1.msra.mxu0 0.0
      %836 = vmatprep.subr.mxu0 0.0
      %837 = vmatpush1.msra.mxu0 0.0
      %838 = vmatprep.subr.mxu0 0.0
      %839 = vmatpush1.msra.mxu0 0.0
      %840 = vmatprep.subr.mxu0 0.0
      %841 = vmatpush1.msra.mxu0 0.0
      %842 = vmatprep.subr.mxu0 0.0
      %843 = vmatpush1.msra.mxu0 %v808
      %844 = vmatprep.subr.mxu0 0.0
      %845 = vmatpush1.msra.mxu0 %v806
      %846 = vmatprep.subr.mxu0 0.0
      %847 = vmatpush2.msra.mxu0 0.0
      %848 = vmatprep.subr.mxu0 0.0
      %849 = vmatpush2.msra.mxu0 0.0
      %850 = vmatprep.subr.mxu0 0.0
      %851 = vmatpush2.msra.mxu0 0.0
      %852 = vmatprep.subr.mxu0 0.0
      %853 = vmatpush2.msra.mxu0 0.0
      %854 = vmatprep.subr.mxu0 0.0
      %855 = vmatpush2.msra.mxu0 0.0
      %856 = vmatprep.subr.mxu0 0.0
      %857 = vmatpush2.msra.mxu0 0.0
      %858 = vmatprep.subr.mxu0 0.0
      %859 = vmatpush2.msra.mxu0 0.0
      %860 = vmatprep.subr.mxu0 0.0
      %861 = vmatpush2.msra.mxu0 0.0
      %862 = vmatprep.subr.mxu0 0.0
      %863 = vmatpush2.msra.mxu0 0.0
      %864 = vmatprep.subr.mxu0 0.0
      %865 = vmatpush2.msra.mxu0 0.0
      %866 = vmatprep.subr.mxu0 0.0
      %867 = vmatpush2.msra.mxu0 0.0
      %868 = vmatprep.subr.mxu0 0.0
      %869 = vmatpush2.msra.mxu0 0.0
      %870 = vmatprep.subr.mxu0 0.0
      %871 = vmatpush2.msra.mxu0 0.0
      %872 = vmatprep.subr.mxu0 0.0
      %873 = vmatpush2.msra.mxu0 0.0
      %874 = vmatprep.subr.mxu0 0.0
      %875 = vmatpush2.msra.mxu0 0.0
      %876 = vmatprep.subr.mxu0 0.0
      %877 = vmatpush2.msra.mxu0 0.0
      %878 = vmatprep.mubr.f32.mxu0 0.0
      %879 = vmatmul.mubr.f32.gmra.mxu0 %v812
      %v880 = vpop.f32.mrf.mxu0
      %v881 = vadd.f32 0.0, %v880
      %v882 = vpop.f32.mrf.mxu0
      %883 = vdwg.mxu0
      %885 = vrot.lane.b32.xlu0 %v881, 24
      %v886 = vpop.permute.xlu0 %885
      %vm888 = vcmask 261312
      %889 = vst.msk [vmem:[%s158] sm:$0xff] %vm888, %v886
      %p890 = scmp.lt.s32.totalorder %s13, 1
      %s891 = scalar_select %p890, %s13, 1
      %s892 = smul.addr %s891, 8
      %s893 = scalar_lea.vmem %s2, %s892
      // Predicated region
      $region29: #{attention_forward.6} parent=27 // pred_check
        %p894 = pneg %p83
      $region30: #{attention_forward.6} parent=27 // pred_check_branch
        %896 = sbr.rel (%p894) target = $region32
      $region31: #{attention_forward.6} parent=27 // pred_region
        _
      $region32: #{attention_forward.6} parent=27 // pred_fallthru
        _
    $region28: #{attention_forward.6} parent=5 // pred_fallthru
      _
    %p897 = scmp.le.s32.totalorder 2, %s8
    // Predicated region
    $region33: #{attention_forward.6} parent=5 // pred_check
      %p898 = pneg %p897
    $region34: #{attention_forward.6} parent=5 // pred_check_branch
      %900 = sbr.rel (%p898) target = $region36
    $region35: #{attention_forward.6} parent=5 // pred_region
      %s901 = ssub.s32 %s8, 2
      // Predicated region
      $region37: #{attention_forward.6} parent=35 // pred_check
        %p902 = pneg %p89
      $region38: #{attention_forward.6} parent=35 // pred_check_branch
        %904 = sbr.rel (%p902) target = $region40
      $region39: #{attention_forward.6} parent=35 // pred_region
        %p905 = scmp.lt.s32.totalorder %s14, 1
        %s906 = scalar_select %p905, %s14, 1
        %s907 = smul.addr %s906, 8
        %s908 = scalar_lea.vmem %s2, %s907
      $region40: #{attention_forward.6} parent=35 // pred_fallthru
        _
    $region36: #{attention_forward.6} parent=5 // pred_fallthru
      _
  $region6: #{attention_forward.6} parent=0 // loop_footer
    %s12 = sadd.s32 1, %s8
  $region7: #{attention_forward.6} parent=0 // loop_footer_branch
    %7 = sbr.rel target = $region3
  $region8: #{attention_forward.6} parent=0 // loop_exit
    _

</llo_original>
